<compile_context>
chip_gen: v5e
topology: v5e:2x2
jax: 0.10.0
libtpu: 0.0.40
codegen_flags: <defaults>
</compile_context>

<pallas_src>
import functools

import jax
import jax.numpy as jnp
from jax import lax
from jax.experimental import pallas as pl
from jax.experimental.pallas import tpu as pltpu

_TWO_PI = 6.283185307179586
_INV_2_24 = 1.0 / (1 << 24)

_LANES = 1024   # lane-dense last dim (multiple of 128)
_TM = 512       # rows per tile: 512 x 1024 f32 = 2 MiB per buffer

# Small compat shim (reference API name is CompilerParams).
_CompilerParams = getattr(pltpu, "CompilerParams", None) or getattr(
    pltpu, "TPUCompilerParams"
)


def _mix32(x):
    """lowbias32/splitmix-style 32-bit finalizer. x: uint32 array."""
    x = x ^ (x >> 16)
    x = x * jnp.uint32(0x7FEB352D)
    x = x ^ (x >> 15)
    x = x * jnp.uint32(0x846CA68B)
    x = x ^ (x >> 16)
    return x


def _noise_kernel(seed_ref, x_ref, o_ref, *, std):
    tm, lanes = x_ref.shape
    half = tm // 2

    pid = pl.program_id(0)
    seed_u = seed_ref[0].astype(jnp.uint32)

    # Unique counter per (tile, element-pair); counters 2k and 2k+1 feed the
    # two independent uniform streams of one Box-Muller pair.
    rows = lax.broadcasted_iota(jnp.int32, (half, lanes), 0)
    cols = lax.broadcasted_iota(jnp.int32, (half, lanes), 1)
    base = pid * (half * lanes)  # per-tile offset -> per-tile/core unique noise
    gidx = (base + rows * lanes + cols).astype(jnp.uint32)
    ctr = gidx * jnp.uint32(2) + seed_u
    b1 = _mix32(ctr)
    b2 = _mix32(ctr + jnp.uint32(1))

    # 24-bit uniforms in (0, 1); u1 strictly > 0 so log() is finite.
    u1 = ((b1 >> 8).astype(jnp.float32) + 0.5) * jnp.float32(_INV_2_24)
    u2 = ((b2 >> 8).astype(jnp.float32) + 0.5) * jnp.float32(_INV_2_24)

    # Box-Muller, sin+cos pairing -> two normals per uniform pair.
    r = jnp.float32(std) * jnp.sqrt(jnp.float32(-2.0) * jnp.log(u1))
    theta = jnp.float32(_TWO_PI) * u2
    z1 = r * jnp.cos(theta)
    z2 = r * jnp.sin(theta)

    o_ref[0:half, :] = (x_ref[0:half, :].astype(jnp.float32) + z1).astype(o_ref.dtype)
    o_ref[half:tm, :] = (x_ref[half:tm, :].astype(jnp.float32) + z2).astype(o_ref.dtype)


def noise_forward(x, std, seed=0):
    """Functional equivalent of Noise.forward.

    x: any-shaped array (module uses NCHW). Returns x + N(0, std) noise if
    std > 1e-6, else x unchanged.
    """
    # TODO(synk): the torch module caches `self.buffer` and mutates x.data in
    # place using the global RNG; functionally we redraw noise per call and the
    # caller threads an explicit `seed` for fresh noise each forward.
    if std <= 1e-6:
        return x

    orig_shape = x.shape
    total = int(x.size)
    flat = x.reshape(-1)

    lanes = _LANES
    m = pl.cdiv(total, lanes)
    if m >= _TM:
        tm = _TM
        m_pad = pl.cdiv(m, tm) * tm
    else:
        m_pad = pl.cdiv(m, 8) * 8  # keep (8, 128) divisibility and tm even
        tm = m_pad

    padded_total = m_pad * lanes
    if padded_total != total:
        flat = jnp.pad(flat, (0, padded_total - total))
    x2 = flat.reshape(m_pad, lanes)

    # Pre-mix the seed on the host so the kernel only adds it to the counter.
    seed_mixed = (int(seed) * 0x9E3779B9 + 0x85EBCA6B) & 0xFFFFFFFF
    seed_i32 = seed_mixed - (1 << 32) if seed_mixed >= (1 << 31) else seed_mixed
    seed_arr = jnp.array([seed_i32], dtype=jnp.int32)

    grid = (m_pad // tm,)
    out2 = pl.pallas_call(
        functools.partial(_noise_kernel, std=float(std)),
        out_shape=jax.ShapeDtypeStruct(x2.shape, x2.dtype),
        grid=grid,
        in_specs=[
            pl.BlockSpec(memory_space=pltpu.SMEM),            # seed scalar
            pl.BlockSpec((tm, lanes), lambda i: (i, 0)),      # tiled input
        ],
        out_specs=pl.BlockSpec((tm, lanes), lambda i: (i, 0)),
        compiler_params=_CompilerParams(
            dimension_semantics=("parallel",),
            vmem_limit_bytes=32 * 1024 * 1024,
        ),
    )(seed_arr, x2)

    out_flat = out2.reshape(-1)
    if padded_total != total:
        out_flat = out_flat[:total]
    return out_flat.reshape(orig_shape)


if __name__ == "__main__":
    key = jax.random.PRNGKey(0)
    x = jax.random.normal(key, (2, 4, 16, 16), dtype=jnp.float32)

    std = 0.5
    y = noise_forward(x, std, seed=0)
    y = jax.block_until_ready(y)

    # Sanity checks: shape/dtype preserved, noise added with roughly the right
    # magnitude, noise depends on the seed, and std <= 1e-6 path is identity.
    assert y.shape == x.shape and y.dtype == x.dtype
    diff = (y - x).astype(jnp.float32)
    assert bool(jnp.all(jnp.isfinite(diff)))
    emp_std = float(jnp.std(diff))
    assert 0.25 * std < emp_std < 4.0 * std, emp_std

    y2 = jax.block_until_ready(noise_forward(x, std, seed=1))
    assert not bool(jnp.all(y2 == y))  # different seed -> different noise

    y_id = noise_forward(x, 0.0)
    assert bool(jnp.all(y_id == x))

    print("KERNEL_OK")
</pallas_src>

<mosaic_0001>
module attributes {stable_mosaic.version = 11 : i64} {
  func.func @_noise_kernel(%arg0: i32, %arg1: memref<1xi32, #tpu.memory_space<smem>>, %arg2: memref<8x1024xf32, #tpu.memory_space<vmem>>, %arg3: memref<8x1024xf32, #tpu.memory_space<vmem>>) attributes {dimension_semantics = [#tpu.dimension_semantics<parallel>], iteration_bounds = array<i64: 1>, scalar_prefetch = 0 : i64, scratch_operands = 0 : i64, tpu.core_type = #tpu.core_type<tc>, window_params = [{transform_indices = @transform_0, window_bounds = array<i64: 1>}, {transform_indices = @transform_1, window_bounds = array<i64: 8, 1024>}, {transform_indices = @transform_2, window_bounds = array<i64: 8, 1024>}]} {
    %c0 = arith.constant 0 : index
    %0 = memref.load %arg1[%c0] : memref<1xi32, #tpu.memory_space<smem>>
    %1 = tpu.iota {dimensions = array<i32: 0>} : vector<4x1024xi32>
    %2 = tpu.iota {dimensions = array<i32: 1>} : vector<4x1024xi32>
    %c4096_i32 = arith.constant 4096 : i32
    %3 = arith.muli %arg0, %c4096_i32 : i32
    %c1024_i32 = arith.constant 1024 : i32
    %4 = vector.broadcast %c1024_i32 : i32 to vector<4x1024xi32>
    %5 = arith.muli %1, %4 : vector<4x1024xi32>
    %6 = vector.broadcast %3 : i32 to vector<4x1024xi32>
    %7 = arith.addi %6, %5 : vector<4x1024xi32>
    %8 = arith.addi %7, %2 : vector<4x1024xi32>
    %c2_i32 = arith.constant 2 : i32
    %9 = vector.broadcast %c2_i32 : i32 to vector<4x1024xi32>
    %10 = arith.muli %8, %9 : vector<4x1024xi32>
    %11 = vector.broadcast %0 : i32 to vector<4x1024xi32>
    %12 = arith.addi %10, %11 : vector<4x1024xi32>
    %c16_i32 = arith.constant 16 : i32
    %13 = vector.broadcast %c16_i32 : i32 to vector<4x1024xi32>
    %14 = arith.shrui %12, %13 : vector<4x1024xi32>
    %15 = arith.xori %12, %14 : vector<4x1024xi32>
    %c2146121005_i32 = arith.constant 2146121005 : i32
    %16 = vector.broadcast %c2146121005_i32 : i32 to vector<4x1024xi32>
    %17 = arith.muli %15, %16 : vector<4x1024xi32>
    %c15_i32 = arith.constant 15 : i32
    %18 = vector.broadcast %c15_i32 : i32 to vector<4x1024xi32>
    %19 = arith.shrui %17, %18 : vector<4x1024xi32>
    %20 = arith.xori %17, %19 : vector<4x1024xi32>
    %c-2073254261_i32 = arith.constant -2073254261 : i32
    %21 = vector.broadcast %c-2073254261_i32 : i32 to vector<4x1024xi32>
    %22 = arith.muli %20, %21 : vector<4x1024xi32>
    %c16_i32_0 = arith.constant 16 : i32
    %23 = vector.broadcast %c16_i32_0 : i32 to vector<4x1024xi32>
    %24 = arith.shrui %22, %23 : vector<4x1024xi32>
    %25 = arith.xori %22, %24 : vector<4x1024xi32>
    %c1_i32 = arith.constant 1 : i32
    %26 = vector.broadcast %c1_i32 : i32 to vector<4x1024xi32>
    %27 = arith.addi %12, %26 : vector<4x1024xi32>
    %c16_i32_1 = arith.constant 16 : i32
    %28 = vector.broadcast %c16_i32_1 : i32 to vector<4x1024xi32>
    %29 = arith.shrui %27, %28 : vector<4x1024xi32>
    %30 = arith.xori %27, %29 : vector<4x1024xi32>
    %c2146121005_i32_2 = arith.constant 2146121005 : i32
    %31 = vector.broadcast %c2146121005_i32_2 : i32 to vector<4x1024xi32>
    %32 = arith.muli %30, %31 : vector<4x1024xi32>
    %c15_i32_3 = arith.constant 15 : i32
    %33 = vector.broadcast %c15_i32_3 : i32 to vector<4x1024xi32>
    %34 = arith.shrui %32, %33 : vector<4x1024xi32>
    %35 = arith.xori %32, %34 : vector<4x1024xi32>
    %c-2073254261_i32_4 = arith.constant -2073254261 : i32
    %36 = vector.broadcast %c-2073254261_i32_4 : i32 to vector<4x1024xi32>
    %37 = arith.muli %35, %36 : vector<4x1024xi32>
    %c16_i32_5 = arith.constant 16 : i32
    %38 = vector.broadcast %c16_i32_5 : i32 to vector<4x1024xi32>
    %39 = arith.shrui %37, %38 : vector<4x1024xi32>
    %40 = arith.xori %37, %39 : vector<4x1024xi32>
    %c8_i32 = arith.constant 8 : i32
    %41 = vector.broadcast %c8_i32 : i32 to vector<4x1024xi32>
    %42 = arith.shrui %25, %41 : vector<4x1024xi32>
    %43 = arith.uitofp %42 : vector<4x1024xi32> to vector<4x1024xf32>
    %cst = arith.constant 5.000000e-01 : f32
    %44 = vector.broadcast %cst : f32 to vector<4x1024xf32>
    %45 = arith.addf %43, %44 : vector<4x1024xf32>
    %cst_6 = arith.constant 5.96046448E-8 : f32
    %46 = vector.broadcast %cst_6 : f32 to vector<4x1024xf32>
    %47 = arith.mulf %45, %46 : vector<4x1024xf32>
    %c8_i32_7 = arith.constant 8 : i32
    %48 = vector.broadcast %c8_i32_7 : i32 to vector<4x1024xi32>
    %49 = arith.shrui %40, %48 : vector<4x1024xi32>
    %50 = arith.uitofp %49 : vector<4x1024xi32> to vector<4x1024xf32>
    %cst_8 = arith.constant 5.000000e-01 : f32
    %51 = vector.broadcast %cst_8 : f32 to vector<4x1024xf32>
    %52 = arith.addf %50, %51 : vector<4x1024xf32>
    %cst_9 = arith.constant 5.96046448E-8 : f32
    %53 = vector.broadcast %cst_9 : f32 to vector<4x1024xf32>
    %54 = arith.mulf %52, %53 : vector<4x1024xf32>
    %55 = math.log %47 : vector<4x1024xf32>
    %cst_10 = arith.constant -2.000000e+00 : f32
    %56 = vector.broadcast %cst_10 : f32 to vector<4x1024xf32>
    %57 = arith.mulf %56, %55 : vector<4x1024xf32>
    %58 = math.sqrt %57 : vector<4x1024xf32>
    %cst_11 = arith.constant 5.000000e-01 : f32
    %59 = vector.broadcast %cst_11 : f32 to vector<4x1024xf32>
    %60 = arith.mulf %59, %58 : vector<4x1024xf32>
    %cst_12 = arith.constant 6.28318548 : f32
    %61 = vector.broadcast %cst_12 : f32 to vector<4x1024xf32>
    %62 = arith.mulf %61, %54 : vector<4x1024xf32>
    %63 = math.cos %62 : vector<4x1024xf32>
    %64 = arith.mulf %60, %63 : vector<4x1024xf32>
    %65 = math.sin %62 : vector<4x1024xf32>
    %66 = arith.mulf %60, %65 : vector<4x1024xf32>
    %c0_13 = arith.constant 0 : index
    %c0_14 = arith.constant 0 : index
    %67 = vector.load %arg2[%c0_13, %c0_14] : memref<8x1024xf32, #tpu.memory_space<vmem>>, vector<4x1024xf32>
    %68 = arith.addf %67, %64 : vector<4x1024xf32>
    %c0_15 = arith.constant 0 : index
    %c0_16 = arith.constant 0 : index
    %69 = vector.load %arg3[%c0_15, %c0_16] : memref<8x1024xf32, #tpu.memory_space<vmem>>, vector<4x1024xf32>
    tpu.vector_store %arg3[%c0_15, %c0_16], %68 {strides = array<i32>} : memref<8x1024xf32, #tpu.memory_space<vmem>>, vector<4x1024xf32>,
    %c4 = arith.constant 4 : index
    %c0_17 = arith.constant 0 : index
    %70 = vector.load %arg2[%c4, %c0_17] : memref<8x1024xf32, #tpu.memory_space<vmem>>, vector<4x1024xf32>
    %71 = arith.addf %70, %66 : vector<4x1024xf32>
    %c4_18 = arith.constant 4 : index
    %c0_19 = arith.constant 0 : index
    %72 = vector.load %arg3[%c4_18, %c0_19] : memref<8x1024xf32, #tpu.memory_space<vmem>>, vector<4x1024xf32>
    tpu.vector_store %arg3[%c4_18, %c0_19], %71 {strides = array<i32>} : memref<8x1024xf32, #tpu.memory_space<vmem>>, vector<4x1024xf32>,
    return
  }
  func.func @transform_0(%arg0: i32) -> i32 {
    %c0_i32 = arith.constant 0 : i32
    %c0_i32_0 = arith.constant 0 : i32
    return %c0_i32 : i32
  }
  func.func @transform_1(%arg0: i32) -> (i32, i32) {
    %c0_i32 = arith.constant 0 : i32
    %c0_i32_0 = arith.constant 0 : i32
    return %arg0, %c0_i32 : i32, i32
  }
  func.func @transform_2(%arg0: i32) -> (i32, i32) {
    %c0_i32 = arith.constant 0 : i32
    %c0_i32_0 = arith.constant 0 : i32
    return %arg0, %c0_i32 : i32, i32
  }
}

</mosaic_0001>

<llo_original>
// kernel: tpu_custom_call.1
$region0: #{tpu_custom_call.1}
  #allocation0 [shape = 'u32[]', space=smem, size = 0x4, offset = 0x4, fixed_abs, tag = 'smem constant byte address 0x4 - core index']
  #allocation1 [shape = 'u32[72,128]{1,0:T(1,128)}', space=vmem, size = 0x9000, scoped, tag = 'internal scratch']
  #allocation2 [shape = 's32[1]{0:T(128)S(6)}', space=smem, size = 0x200, scoped, tag = 'scoped memory for tpu_custom_call.1']
  %s0 = inlined_call_operand.<no memory space> [shape: s32[1], index: 0, kind: input, shape index: {}]
  %s1 = inlined_call_operand.hbm [shape: f32[8,1024], index: 1, kind: input, shape index: {}]
  %s2 = inlined_call_operand.hbm [shape: f32[8,1024], index: 2, kind: output, shape index: {}]
  %s3 = sld [smem:[#allocation0]]
  $region22: #{tpu_custom_call.1} parent=0
    _
  %s5 = ssub.s32 1, %s3
  %s6 = scalar_select 0, %s5, %s3
  %7 = sst [smem:[#allocation2]] %s0
  $region1: #{tpu_custom_call.1} parent=0
    #allocation3 [shape = 'u8[32768]{0}', space=vmem, size = 0x8000, scoped, tag = 'input window, operand 1, single buffered']
    #allocation4 [shape = 's32[1]{0}', space=sflag, size = 0x4, scoped, tag = 'scoped memory for tpu_custom_call.1']
    #allocation5 [shape = 's32[1]{0}', space=sflag, size = 0x4, scoped, tag = 'scoped memory for tpu_custom_call.1']
    #allocation6 [shape = 'u8[32768]{0}', space=vmem, size = 0x8000, scoped, tag = 'output window, operand 0, single buffered']
    %8 = vsyncpa [#allocation4], 0
    %9 = vsyncpa [#allocation5], 0
    // Predicated region
    $region2: #{tpu_custom_call.1} parent=1 // pred_check
      _
    $region3: #{tpu_custom_call.1} parent=1 // pred_check_branch
      %11 = sbr.rel (0) target = $region5
    $region4: #{tpu_custom_call.1} parent=1 // pred_region
      _
    $region5: #{tpu_custom_call.1} parent=1 // pred_fallthru
      _
    // Predicated region
    $region6: #{tpu_custom_call.1} parent=1 // pred_check
      _
    $region7: #{tpu_custom_call.1} parent=1 // pred_check_branch
      %13 = sbr.rel (0) target = $region9
    $region8: #{tpu_custom_call.1} parent=1 // pred_region
      %15 = vsyncadd [#allocation4], 0
      %s17 = sshll.u32 %s1, 4
      %s18 = int_to_ptr.hbm [resolvable:$true] %s17
      %s19 = sshll.u32 [#allocation3], 4
      %s20 = int_to_ptr.vmem [resolvable:$true] %s19
      %22 = dma.hbm_to_vmem [thread:$0]  %s18, 1024, %s20, [#allocation4]
    $region9: #{tpu_custom_call.1} parent=1 // pred_fallthru
      _
    // Predicated region
    $region10: #{tpu_custom_call.1} parent=1 // pred_check
      _
    $region11: #{tpu_custom_call.1} parent=1 // pred_check_branch
      %24 = sbr.rel (0) target = $region13
    $region12: #{tpu_custom_call.1} parent=1 // pred_region
      %26 = dma.done [#allocation4], 1024
    $region13: #{tpu_custom_call.1} parent=1 // pred_fallthru
      _
    %s27 = sld [smem:[#allocation2]]
    %v28 = vlaneseq
    %v29 = vshrl.u32 %v28, 7
    %v30 = vlaneseq
    %v31 = vand.u32 %v30, 127
    %v32 = vadd.s32 %v31, 128
    %v33 = vadd.s32 %v31, 256
    %v34 = vadd.s32 %v31, 384
    %v35 = vadd.s32 %v31, 512
    %v36 = vadd.s32 %v31, 640
    %v37 = vadd.s32 %v31, 768
    %v38 = vadd.s32 %v31, 896
    %s39 = smul.u32 0, 4096
    %v40 = vmul.u32 %v29, 1024
    %v41 = vstv %s39
    %v42 = vadd.s32 %v41, %v40
    %v43 = vadd.s32 %v42, %v31
    %v44 = vadd.s32 %v42, %v32
    %v45 = vadd.s32 %v42, %v33
    %v46 = vadd.s32 %v42, %v34
    %v47 = vadd.s32 %v42, %v35
    %v48 = vadd.s32 %v42, %v36
    %v49 = vadd.s32 %v42, %v37
    %v50 = vadd.s32 %v42, %v38
    %v51 = vmul.u32 %v43, 2
    %v52 = vmul.u32 %v44, 2
    %v53 = vmul.u32 %v45, 2
    %v54 = vmul.u32 %v46, 2
    %v55 = vmul.u32 %v47, 2
    %v56 = vmul.u32 %v48, 2
    %v57 = vmul.u32 %v49, 2
    %v58 = vmul.u32 %v50, 2
    %v59 = vstv %s27
    %v60 = vadd.s32 %v51, %v59
    %v61 = vadd.s32 %v52, %v59
    %v62 = vadd.s32 %v53, %v59
    %v63 = vadd.s32 %v54, %v59
    %v64 = vadd.s32 %v55, %v59
    %v65 = vadd.s32 %v56, %v59
    %v66 = vadd.s32 %v57, %v59
    %v67 = vadd.s32 %v58, %v59
    %v68 = vshrl.u32 %v60, 16
    %v69 = vshrl.u32 %v61, 16
    %v70 = vshrl.u32 %v62, 16
    %v71 = vshrl.u32 %v63, 16
    %v72 = vshrl.u32 %v64, 16
    %v73 = vshrl.u32 %v65, 16
    %v74 = vshrl.u32 %v66, 16
    %v75 = vshrl.u32 %v67, 16
    %v76 = vxor.u32 %v60, %v68
    %v77 = vxor.u32 %v61, %v69
    %v78 = vxor.u32 %v62, %v70
    %v79 = vxor.u32 %v63, %v71
    %v80 = vxor.u32 %v64, %v72
    %v81 = vxor.u32 %v65, %v73
    %v82 = vxor.u32 %v66, %v74
    %v83 = vxor.u32 %v67, %v75
    %v84 = vmul.u32 %v76, 2146121005
    %v85 = vmul.u32 %v77, 2146121005
    %v86 = vmul.u32 %v78, 2146121005
    %v87 = vmul.u32 %v79, 2146121005
    %v88 = vmul.u32 %v80, 2146121005
    %v89 = vmul.u32 %v81, 2146121005
    %v90 = vmul.u32 %v82, 2146121005
    %v91 = vmul.u32 %v83, 2146121005
    %v92 = vshrl.u32 %v84, 15
    %v93 = vshrl.u32 %v85, 15
    %v94 = vshrl.u32 %v86, 15
    %v95 = vshrl.u32 %v87, 15
    %v96 = vshrl.u32 %v88, 15
    %v97 = vshrl.u32 %v89, 15
    %v98 = vshrl.u32 %v90, 15
    %v99 = vshrl.u32 %v91, 15
    %v100 = vxor.u32 %v84, %v92
    %v101 = vxor.u32 %v85, %v93
    %v102 = vxor.u32 %v86, %v94
    %v103 = vxor.u32 %v87, %v95
    %v104 = vxor.u32 %v88, %v96
    %v105 = vxor.u32 %v89, %v97
    %v106 = vxor.u32 %v90, %v98
    %v107 = vxor.u32 %v91, %v99
    %v108 = vmul.u32 %v100, 2221713035
    %v109 = vmul.u32 %v101, 2221713035
    %v110 = vmul.u32 %v102, 2221713035
    %v111 = vmul.u32 %v103, 2221713035
    %v112 = vmul.u32 %v104, 2221713035
    %v113 = vmul.u32 %v105, 2221713035
    %v114 = vmul.u32 %v106, 2221713035
    %v115 = vmul.u32 %v107, 2221713035
    %v116 = vshrl.u32 %v108, 16
    %v117 = vshrl.u32 %v109, 16
    %v118 = vshrl.u32 %v110, 16
    %v119 = vshrl.u32 %v111, 16
    %v120 = vshrl.u32 %v112, 16
    %v121 = vshrl.u32 %v113, 16
    %v122 = vshrl.u32 %v114, 16
    %v123 = vshrl.u32 %v115, 16
    %v124 = vxor.u32 %v108, %v116
    %v125 = vxor.u32 %v109, %v117
    %v126 = vxor.u32 %v110, %v118
    %v127 = vxor.u32 %v111, %v119
    %v128 = vxor.u32 %v112, %v120
    %v129 = vxor.u32 %v113, %v121
    %v130 = vxor.u32 %v114, %v122
    %v131 = vxor.u32 %v115, %v123
    %v132 = vadd.s32 %v60, 1
    %v133 = vadd.s32 %v61, 1
    %v134 = vadd.s32 %v62, 1
    %v135 = vadd.s32 %v63, 1
    %v136 = vadd.s32 %v64, 1
    %v137 = vadd.s32 %v65, 1
    %v138 = vadd.s32 %v66, 1
    %v139 = vadd.s32 %v67, 1
    %v140 = vshrl.u32 %v132, 16
    %v141 = vshrl.u32 %v133, 16
    %v142 = vshrl.u32 %v134, 16
    %v143 = vshrl.u32 %v135, 16
    %v144 = vshrl.u32 %v136, 16
    %v145 = vshrl.u32 %v137, 16
    %v146 = vshrl.u32 %v138, 16
    %v147 = vshrl.u32 %v139, 16
    %v148 = vxor.u32 %v132, %v140
    %v149 = vxor.u32 %v133, %v141
    %v150 = vxor.u32 %v134, %v142
    %v151 = vxor.u32 %v135, %v143
    %v152 = vxor.u32 %v136, %v144
    %v153 = vxor.u32 %v137, %v145
    %v154 = vxor.u32 %v138, %v146
    %v155 = vxor.u32 %v139, %v147
    %v156 = vmul.u32 %v148, 2146121005
    %v157 = vmul.u32 %v149, 2146121005
    %v158 = vmul.u32 %v150, 2146121005
    %v159 = vmul.u32 %v151, 2146121005
    %v160 = vmul.u32 %v152, 2146121005
    %v161 = vmul.u32 %v153, 2146121005
    %v162 = vmul.u32 %v154, 2146121005
    %v163 = vmul.u32 %v155, 2146121005
    %v164 = vshrl.u32 %v156, 15
    %v165 = vshrl.u32 %v157, 15
    %v166 = vshrl.u32 %v158, 15
    %v167 = vshrl.u32 %v159, 15
    %v168 = vshrl.u32 %v160, 15
    %v169 = vshrl.u32 %v161, 15
    %v170 = vshrl.u32 %v162, 15
    %v171 = vshrl.u32 %v163, 15
    %v172 = vxor.u32 %v156, %v164
    %v173 = vxor.u32 %v157, %v165
    %v174 = vxor.u32 %v158, %v166
    %v175 = vxor.u32 %v159, %v167
    %v176 = vxor.u32 %v160, %v168
    %v177 = vxor.u32 %v161, %v169
    %v178 = vxor.u32 %v162, %v170
    %v179 = vxor.u32 %v163, %v171
    %v180 = vmul.u32 %v172, 2221713035
    %v181 = vmul.u32 %v173, 2221713035
    %v182 = vmul.u32 %v174, 2221713035
    %v183 = vmul.u32 %v175, 2221713035
    %v184 = vmul.u32 %v176, 2221713035
    %v185 = vmul.u32 %v177, 2221713035
    %v186 = vmul.u32 %v178, 2221713035
    %v187 = vmul.u32 %v179, 2221713035
    %v188 = vshrl.u32 %v180, 16
    %v189 = vshrl.u32 %v181, 16
    %v190 = vshrl.u32 %v182, 16
    %v191 = vshrl.u32 %v183, 16
    %v192 = vshrl.u32 %v184, 16
    %v193 = vshrl.u32 %v185, 16
    %v194 = vshrl.u32 %v186, 16
    %v195 = vshrl.u32 %v187, 16
    %v196 = vxor.u32 %v180, %v188
    %v197 = vxor.u32 %v181, %v189
    %v198 = vxor.u32 %v182, %v190
    %v199 = vxor.u32 %v183, %v191
    %v200 = vxor.u32 %v184, %v192
    %v201 = vxor.u32 %v185, %v193
    %v202 = vxor.u32 %v186, %v194
    %v203 = vxor.u32 %v187, %v195
    %v204 = vshrl.u32 %v124, 8
    %v205 = vshrl.u32 %v125, 8
    %v206 = vshrl.u32 %v126, 8
    %v207 = vshrl.u32 %v127, 8
    %v208 = vshrl.u32 %v128, 8
    %v209 = vshrl.u32 %v129, 8
    %v210 = vshrl.u32 %v130, 8
    %v211 = vshrl.u32 %v131, 8
    %v212 = vshrl.u32 %v204, 16
    %v213 = vand.u32 %v204, 65535
    %v214 = vcvt.s32.f32 %v212
    %v215 = vmul.f32 %v214, 65536.0
    %v216 = vcvt.s32.f32 %v213
    %v217 = vadd.f32 %v215, %v216
    %v218 = vshrl.u32 %v205, 16
    %v219 = vand.u32 %v205, 65535
    %v220 = vcvt.s32.f32 %v218
    %v221 = vmul.f32 %v220, 65536.0
    %v222 = vcvt.s32.f32 %v219
    %v223 = vadd.f32 %v221, %v222
    %v224 = vshrl.u32 %v206, 16
    %v225 = vand.u32 %v206, 65535
    %v226 = vcvt.s32.f32 %v224
    %v227 = vmul.f32 %v226, 65536.0
    %v228 = vcvt.s32.f32 %v225
    %v229 = vadd.f32 %v227, %v228
    %v230 = vshrl.u32 %v207, 16
    %v231 = vand.u32 %v207, 65535
    %v232 = vcvt.s32.f32 %v230
    %v233 = vmul.f32 %v232, 65536.0
    %v234 = vcvt.s32.f32 %v231
    %v235 = vadd.f32 %v233, %v234
    %v236 = vshrl.u32 %v208, 16
    %v237 = vand.u32 %v208, 65535
    %v238 = vcvt.s32.f32 %v236
    %v239 = vmul.f32 %v238, 65536.0
    %v240 = vcvt.s32.f32 %v237
    %v241 = vadd.f32 %v239, %v240
    %v242 = vshrl.u32 %v209, 16
    %v243 = vand.u32 %v209, 65535
    %v244 = vcvt.s32.f32 %v242
    %v245 = vmul.f32 %v244, 65536.0
    %v246 = vcvt.s32.f32 %v243
    %v247 = vadd.f32 %v245, %v246
    %v248 = vshrl.u32 %v210, 16
    %v249 = vand.u32 %v210, 65535
    %v250 = vcvt.s32.f32 %v248
    %v251 = vmul.f32 %v250, 65536.0
    %v252 = vcvt.s32.f32 %v249
    %v253 = vadd.f32 %v251, %v252
    %v254 = vshrl.u32 %v211, 16
    %v255 = vand.u32 %v211, 65535
    %v256 = vcvt.s32.f32 %v254
    %v257 = vmul.f32 %v256, 65536.0
    %v258 = vcvt.s32.f32 %v255
    %v259 = vadd.f32 %v257, %v258
    %v260 = vadd.f32 %v217, 0.5
    %v261 = vadd.f32 %v223, 0.5
    %v262 = vadd.f32 %v229, 0.5
    %v263 = vadd.f32 %v235, 0.5
    %v264 = vadd.f32 %v241, 0.5
    %v265 = vadd.f32 %v247, 0.5
    %v266 = vadd.f32 %v253, 0.5
    %v267 = vadd.f32 %v259, 0.5
    %v268 = vmul.f32 %v260, 5.9604645e-08
    %v269 = vmul.f32 %v261, 5.9604645e-08
    %v270 = vmul.f32 %v262, 5.9604645e-08
    %v271 = vmul.f32 %v263, 5.9604645e-08
    %v272 = vmul.f32 %v264, 5.9604645e-08
    %v273 = vmul.f32 %v265, 5.9604645e-08
    %v274 = vmul.f32 %v266, 5.9604645e-08
    %v275 = vmul.f32 %v267, 5.9604645e-08
    %v276 = vshrl.u32 %v196, 8
    %v277 = vshrl.u32 %v197, 8
    %v278 = vshrl.u32 %v198, 8
    %v279 = vshrl.u32 %v199, 8
    %v280 = vshrl.u32 %v200, 8
    %v281 = vshrl.u32 %v201, 8
    %v282 = vshrl.u32 %v202, 8
    %v283 = vshrl.u32 %v203, 8
    %v284 = vshrl.u32 %v276, 16
    %v285 = vand.u32 %v276, 65535
    %v286 = vcvt.s32.f32 %v284
    %v287 = vmul.f32 %v286, 65536.0
    %v288 = vcvt.s32.f32 %v285
    %v289 = vadd.f32 %v287, %v288
    %v290 = vshrl.u32 %v277, 16
    %v291 = vand.u32 %v277, 65535
    %v292 = vcvt.s32.f32 %v290
    %v293 = vmul.f32 %v292, 65536.0
    %v294 = vcvt.s32.f32 %v291
    %v295 = vadd.f32 %v293, %v294
    %v296 = vshrl.u32 %v278, 16
    %v297 = vand.u32 %v278, 65535
    %v298 = vcvt.s32.f32 %v296
    %v299 = vmul.f32 %v298, 65536.0
    %v300 = vcvt.s32.f32 %v297
    %v301 = vadd.f32 %v299, %v300
    %v302 = vshrl.u32 %v279, 16
    %v303 = vand.u32 %v279, 65535
    %v304 = vcvt.s32.f32 %v302
    %v305 = vmul.f32 %v304, 65536.0
    %v306 = vcvt.s32.f32 %v303
    %v307 = vadd.f32 %v305, %v306
    %v308 = vshrl.u32 %v280, 16
    %v309 = vand.u32 %v280, 65535
    %v310 = vcvt.s32.f32 %v308
    %v311 = vmul.f32 %v310, 65536.0
    %v312 = vcvt.s32.f32 %v309
    %v313 = vadd.f32 %v311, %v312
    %v314 = vshrl.u32 %v281, 16
    %v315 = vand.u32 %v281, 65535
    %v316 = vcvt.s32.f32 %v314
    %v317 = vmul.f32 %v316, 65536.0
    %v318 = vcvt.s32.f32 %v315
    %v319 = vadd.f32 %v317, %v318
    %v320 = vshrl.u32 %v282, 16
    %v321 = vand.u32 %v282, 65535
    %v322 = vcvt.s32.f32 %v320
    %v323 = vmul.f32 %v322, 65536.0
    %v324 = vcvt.s32.f32 %v321
    %v325 = vadd.f32 %v323, %v324
    %v326 = vshrl.u32 %v283, 16
    %v327 = vand.u32 %v283, 65535
    %v328 = vcvt.s32.f32 %v326
    %v329 = vmul.f32 %v328, 65536.0
    %v330 = vcvt.s32.f32 %v327
    %v331 = vadd.f32 %v329, %v330
    %v332 = vadd.f32 %v289, 0.5
    %v333 = vadd.f32 %v295, 0.5
    %v334 = vadd.f32 %v301, 0.5
    %v335 = vadd.f32 %v307, 0.5
    %v336 = vadd.f32 %v313, 0.5
    %v337 = vadd.f32 %v319, 0.5
    %v338 = vadd.f32 %v325, 0.5
    %v339 = vadd.f32 %v331, 0.5
    %v340 = vmul.f32 %v332, 5.9604645e-08
    %v341 = vmul.f32 %v333, 5.9604645e-08
    %v342 = vmul.f32 %v334, 5.9604645e-08
    %v343 = vmul.f32 %v335, 5.9604645e-08
    %v344 = vmul.f32 %v336, 5.9604645e-08
    %v345 = vmul.f32 %v337, 5.9604645e-08
    %v346 = vmul.f32 %v338, 5.9604645e-08
    %v347 = vmul.f32 %v339, 5.9604645e-08
    %v348 = vlog2.pop %v268
    %v349 = vmul.f32 %v348, 0.6931472
    %v350 = vlog2.pop %v269
    %v351 = vmul.f32 %v350, 0.6931472
    %v352 = vlog2.pop %v270
    %v353 = vmul.f32 %v352, 0.6931472
    %v354 = vlog2.pop %v271
    %v355 = vmul.f32 %v354, 0.6931472
    %v356 = vlog2.pop %v272
    %v357 = vmul.f32 %v356, 0.6931472
    %v358 = vlog2.pop %v273
    %v359 = vmul.f32 %v358, 0.6931472
    %v360 = vlog2.pop %v274
    %v361 = vmul.f32 %v360, 0.6931472
    %v362 = vlog2.pop %v275
    %v363 = vmul.f32 %v362, 0.6931472
    %v364 = vmul.f32 %v349, -2.0
    %v365 = vmul.f32 %v351, -2.0
    %v366 = vmul.f32 %v353, -2.0
    %v367 = vmul.f32 %v355, -2.0
    %v368 = vmul.f32 %v357, -2.0
    %v369 = vmul.f32 %v359, -2.0
    %v370 = vmul.f32 %v361, -2.0
    %v371 = vmul.f32 %v363, -2.0
    %v372 = vrsqrt.pop %v364
    %v373 = vmul.f32 %v372, %v364
    %v374 = vmul.f32 %v373, %v372
    %v375 = vmul.f32 0.5, %v374
    %v376 = vsub.f32 1.5, %v375
    %v377 = vmul.f32 %v372, %v376
    %v378 = vmul.f32 %v364, %v377
    %vm379 = vcmp.eq.f32.partialorder %v364, inf
    %v380 = vsel %vm379, %v364, %v378
    %vm381 = vcmp.eq.f32.partialorder %v364, 0.0
    %v382 = vand.u32 %v364, 2147483648
    %v383 = vsel %vm381, %v382, %v380
    %v384 = vrsqrt.pop %v365
    %v385 = vmul.f32 %v384, %v365
    %v386 = vmul.f32 %v385, %v384
    %v387 = vmul.f32 0.5, %v386
    %v388 = vsub.f32 1.5, %v387
    %v389 = vmul.f32 %v384, %v388
    %v390 = vmul.f32 %v365, %v389
    %vm391 = vcmp.eq.f32.partialorder %v365, inf
    %v392 = vsel %vm391, %v365, %v390
    %vm393 = vcmp.eq.f32.partialorder %v365, 0.0
    %v394 = vand.u32 %v365, 2147483648
    %v395 = vsel %vm393, %v394, %v392
    %v396 = vrsqrt.pop %v366
    %v397 = vmul.f32 %v396, %v366
    %v398 = vmul.f32 %v397, %v396
    %v399 = vmul.f32 0.5, %v398
    %v400 = vsub.f32 1.5, %v399
    %v401 = vmul.f32 %v396, %v400
    %v402 = vmul.f32 %v366, %v401
    %vm403 = vcmp.eq.f32.partialorder %v366, inf
    %v404 = vsel %vm403, %v366, %v402
    %vm405 = vcmp.eq.f32.partialorder %v366, 0.0
    %v406 = vand.u32 %v366, 2147483648
    %v407 = vsel %vm405, %v406, %v404
    %v408 = vrsqrt.pop %v367
    %v409 = vmul.f32 %v408, %v367
    %v410 = vmul.f32 %v409, %v408
    %v411 = vmul.f32 0.5, %v410
    %v412 = vsub.f32 1.5, %v411
    %v413 = vmul.f32 %v408, %v412
    %v414 = vmul.f32 %v367, %v413
    %vm415 = vcmp.eq.f32.partialorder %v367, inf
    %v416 = vsel %vm415, %v367, %v414
    %vm417 = vcmp.eq.f32.partialorder %v367, 0.0
    %v418 = vand.u32 %v367, 2147483648
    %v419 = vsel %vm417, %v418, %v416
    %v420 = vrsqrt.pop %v368
    %v421 = vmul.f32 %v420, %v368
    %v422 = vmul.f32 %v421, %v420
    %v423 = vmul.f32 0.5, %v422
    %v424 = vsub.f32 1.5, %v423
    %v425 = vmul.f32 %v420, %v424
    %v426 = vmul.f32 %v368, %v425
    %vm427 = vcmp.eq.f32.partialorder %v368, inf
    %v428 = vsel %vm427, %v368, %v426
    %vm429 = vcmp.eq.f32.partialorder %v368, 0.0
    %v430 = vand.u32 %v368, 2147483648
    %v431 = vsel %vm429, %v430, %v428
    %v432 = vrsqrt.pop %v369
    %v433 = vmul.f32 %v432, %v369
    %v434 = vmul.f32 %v433, %v432
    %v435 = vmul.f32 0.5, %v434
    %v436 = vsub.f32 1.5, %v435
    %v437 = vmul.f32 %v432, %v436
    %v438 = vmul.f32 %v369, %v437
    %vm439 = vcmp.eq.f32.partialorder %v369, inf
    %v440 = vsel %vm439, %v369, %v438
    %vm441 = vcmp.eq.f32.partialorder %v369, 0.0
    %v442 = vand.u32 %v369, 2147483648
    %v443 = vsel %vm441, %v442, %v440
    %v444 = vrsqrt.pop %v370
    %v445 = vmul.f32 %v444, %v370
    %v446 = vmul.f32 %v445, %v444
    %v447 = vmul.f32 0.5, %v446
    %v448 = vsub.f32 1.5, %v447
    %v449 = vmul.f32 %v444, %v448
    %v450 = vmul.f32 %v370, %v449
    %vm451 = vcmp.eq.f32.partialorder %v370, inf
    %v452 = vsel %vm451, %v370, %v450
    %vm453 = vcmp.eq.f32.partialorder %v370, 0.0
    %v454 = vand.u32 %v370, 2147483648
    %v455 = vsel %vm453, %v454, %v452
    %v456 = vrsqrt.pop %v371
    %v457 = vmul.f32 %v456, %v371
    %v458 = vmul.f32 %v457, %v456
    %v459 = vmul.f32 0.5, %v458
    %v460 = vsub.f32 1.5, %v459
    %v461 = vmul.f32 %v456, %v460
    %v462 = vmul.f32 %v371, %v461
    %vm463 = vcmp.eq.f32.partialorder %v371, inf
    %v464 = vsel %vm463, %v371, %v462
    %vm465 = vcmp.eq.f32.partialorder %v371, 0.0
    %v466 = vand.u32 %v371, 2147483648
    %v467 = vsel %vm465, %v466, %v464
    %v468 = vmul.f32 %v383, 0.5
    %v469 = vmul.f32 %v395, 0.5
    %v470 = vmul.f32 %v407, 0.5
    %v471 = vmul.f32 %v419, 0.5
    %v472 = vmul.f32 %v431, 0.5
    %v473 = vmul.f32 %v443, 0.5
    %v474 = vmul.f32 %v455, 0.5
    %v475 = vmul.f32 %v467, 0.5
    %v476 = vmul.f32 %v340, 6.2831855
    %v477 = vmul.f32 %v341, 6.2831855
    %v478 = vmul.f32 %v342, 6.2831855
    %v479 = vmul.f32 %v343, 6.2831855
    %v480 = vmul.f32 %v344, 6.2831855
    %v481 = vmul.f32 %v345, 6.2831855
    %v482 = vmul.f32 %v346, 6.2831855
    %v483 = vmul.f32 %v347, 6.2831855
    %v484 = vand.u32 2147483647, %v476
    %vm485 = vcmp.le.f32.partialorder %v484, 0.7853982
    %vm486 = vcmp.lt.s32.totalorder %v476, 0
    %v487 = vand.u32 %v476, 2139095040
    %v488 = vshrl.u32 %v487, 23
    %v489 = vsub.s32 %v488, 127
    %v490 = vand.u32 2147483647, %v476
    %v491 = vand.u32 %v490, 8388607
    %v492 = vor.u32 %v491, 8388608
    %v493 = vsub.s32 0, %v492
    %v494 = vadd.s32 %v489, 1
    %vm495 = vcmp.gt.s32.totalorder %v494, 0
    %v496 = vsel %vm495, %v494, 0
    %v497 = vshrl.u32 %v496, 5
    %v498 = vand.u32 %v496, 31
    %v499 = vsub.s32 32, %v498
    %v500 = vshrl.u32 683565275, %v499
    %v501 = vshll.u32 683565275, %v498
    %v502 = vshrl.u32 2475754826, %v499
    %v503 = vor.u32 %v501, %v502
    %v504 = vshll.u32 2475754826, %v498
    %v505 = vshrl.u32 2131351028, %v499
    %v506 = vor.u32 %v504, %v505
    %v507 = vshll.u32 2131351028, %v498
    %v508 = vshrl.u32 2102212464, %v499
    %v509 = vor.u32 %v507, %v508
    %v510 = vshll.u32 2102212464, %v498
    %v511 = vshrl.u32 920167782, %v499
    %v512 = vor.u32 %v510, %v511
    %v513 = vshll.u32 920167782, %v498
    %v514 = vshrl.u32 1326507024, %v499
    %v515 = vor.u32 %v513, %v514
    %vm516 = vcmp.lt.s32.totalorder %v497, 1
    %vm517 = vcmp.lt.s32.totalorder %v497, 2
    %vm518 = vcmp.lt.s32.totalorder %v497, 3
    %vm519 = vcmp.lt.s32.totalorder %v497, 4
    %v520 = vsel %vm516, %v500, %v503
    %v521 = vsel %vm519, %v509, 2102212464
    %v522 = vsel %vm518, %v506, %v521
    %v523 = vsel %vm517, %v520, %v522
    %v524 = vsel %vm516, %v503, %v506
    %v525 = vsel %vm519, %v512, 920167782
    %v526 = vsel %vm518, %v509, %v525
    %v527 = vsel %vm517, %v524, %v526
    %v528 = vsel %vm516, %v506, %v509
    %v529 = vsel %vm519, %v515, 1326507024
    %v530 = vsel %vm518, %v512, %v529
    %v531 = vsel %vm517, %v528, %v530
    %v532 = vshll.u32 %v492, 8
    %v533 = vand.u32 %v532, 65535
    %v534 = vshrl.u32 %v532, 16
    %v535 = vand.u32 %v531, 65535
    %v536 = vshrl.u32 %v531, 16
    %v537 = vmul.u32 %v533, %v535
    %v538 = vmul.u32 %v533, %v536
    %v539 = vmul.u32 %v534, %v535
    %v540 = vmul.u32 %v534, %v536
    %v541 = vshll.u32 %v538, 16
    %v542 = vshrl.u32 %v538, 16
    %v543 = vshll.u32 %v539, 16
    %v544 = vshrl.u32 %v539, 16
    %vm545 = vc.u32 %v537, %v541
    %v546 = vsel %vm545, 1, 0
    %v547 = vadd.s32 %v537, %v541
    %v548 = vadd.s32 %v540, %v546
    %vm549 = vc.u32 %v547, %v543
    %v550 = vsel %vm549, 1, 0
    %v551 = vadd.s32 %v547, %v543
    %v552 = vadd.s32 %v548, %v550
    %v553 = vadd.s32 %v552, %v542
    %v554 = vadd.s32 %v553, %v544
    %v555 = vand.u32 %v532, 65535
    %v556 = vshrl.u32 %v532, 16
    %v557 = vand.u32 %v527, 65535
    %v558 = vshrl.u32 %v527, 16
    %v559 = vmul.u32 %v555, %v557
    %v560 = vmul.u32 %v555, %v558
    %v561 = vmul.u32 %v556, %v557
    %v562 = vmul.u32 %v556, %v558
    %v563 = vshll.u32 %v560, 16
    %v564 = vshrl.u32 %v560, 16
    %v565 = vshll.u32 %v561, 16
    %v566 = vshrl.u32 %v561, 16
    %vm567 = vc.u32 %v559, %v563
    %v568 = vsel %vm567, 1, 0
    %v569 = vadd.s32 %v559, %v563
    %v570 = vadd.s32 %v562, %v568
    %vm571 = vc.u32 %v569, %v565
    %v572 = vsel %vm571, 1, 0
    %v573 = vadd.s32 %v569, %v565
    %v574 = vadd.s32 %v570, %v572
    %v575 = vadd.s32 %v574, %v564
    %v576 = vadd.s32 %v575, %v566
    %v577 = vmul.u32 %v532, %v523
    %v578 = vadd.s32 %v554, %v573
    %vm579 = vc.u32 %v554, %v573
    %v580 = vadd.s32 %v576, 1
    %v581 = vsel %vm579, %v580, %v576
    %v582 = vadd.s32 %v577, %v581
    %v583 = vadd.s32 %v582, 536870912
    %v584 = vshrl.u32 %v583, 30
    %v585 = vshll.u32 %v584, 30
    %v586 = vsub.s32 %v582, %v585
    %vm587 = vcmp.lt.s32.totalorder %v586, 0
    %v588 = vsub.s32 0, %v586
    %v589 = vsel %vm587, %v588, %v586
    %v590 = vclz %v589
    %v591 = vsub.s32 %v590, 2
    %vm592 = vcmp.gt.s32.totalorder 0, %v591
    %v593 = vsel %vm592, 0, %v591
    %v594 = vsub.s32 32, %v593
    %v595 = vshll.u32 %v586, %v593
    %v596 = vshrl.u32 %v578, %v594
    %v597 = vor.u32 %v595, %v596
    %v598 = vsub.s32 4294967266, %v593
    %v599 = vadd.s32 %v598, 127
    %v600 = vshll.u32 %v599, 23
    %v601 = vor.u32 4788187, %v600
    %v602 = vand.u32 2147483647, %v601
    %v604 = vcvt.s32.f32 %v597
    %v605 = vmul.f32 %v604, %v602
    %v606 = vxor.u32 %v605, 2147483648
    %v607 = vsel %vm486, %v606, %v605
    %v608 = vsub.s32 4, %v584
    %v609 = vsel %vm486, %v608, %v584
    %v610 = vsel %vm485, %v476, %v607
    %v611 = vsel %vm485, 0, %v609
    %v612 = vmul.f32 %v610, %v610
    %v613 = vmul.f32 %v612, -0.001358992
    %v614 = vadd.f32 %v613, 0.041655596
    %v615 = vmul.f32 %v612, %v614
    %v616 = vadd.f32 %v615, -0.4999988
    %v617 = vmul.f32 %v612, %v616
    %v618 = vadd.f32 1.0, %v617
    %v619 = vmul.f32 %v610, %v610
    %v620 = vmul.f32 %v619, -0.00019511016
    %v621 = vadd.f32 %v620, 0.008332121
    %v622 = vmul.f32 %v619, %v621
    %v623 = vadd.f32 %v622, -0.16666654
    %v624 = vmul.f32 %v619, %v623
    %v625 = vadd.f32 %v624, 1.0
    %v626 = vmul.f32 %v625, %v610
    %vm627 = vweird.f32 %v476
    %v628 = vand.u32 %v611, 3
    %vm629 = vcmp.lt.s32.totalorder %v628, 2
    %vm630 = vcmp.eq.s32.totalorder %v628, 0
    %v631 = vxor.u32 %v626, 2147483648
    %v632 = vsel %vm630, %v618, %v631
    %vm633 = vcmp.eq.s32.totalorder %v628, 2
    %v634 = vxor.u32 %v618, 2147483648
    %v635 = vsel %vm633, %v634, %v626
    %v636 = vsel %vm629, %v632, %v635
    %v637 = vsel %vm627, nan, %v636
    %v638 = vand.u32 2147483647, %v477
    %vm639 = vcmp.le.f32.partialorder %v638, 0.7853982
    %vm640 = vcmp.lt.s32.totalorder %v477, 0
    %v641 = vand.u32 %v477, 2139095040
    %v642 = vshrl.u32 %v641, 23
    %v643 = vsub.s32 %v642, 127
    %v644 = vand.u32 2147483647, %v477
    %v645 = vand.u32 %v644, 8388607
    %v646 = vor.u32 %v645, 8388608
    %v647 = vsub.s32 0, %v646
    %v648 = vadd.s32 %v643, 1
    %vm649 = vcmp.gt.s32.totalorder %v648, 0
    %v650 = vsel %vm649, %v648, 0
    %v651 = vshrl.u32 %v650, 5
    %v652 = vand.u32 %v650, 31
    %v653 = vsub.s32 32, %v652
    %v654 = vshrl.u32 683565275, %v653
    %v655 = vshll.u32 683565275, %v652
    %v656 = vshrl.u32 2475754826, %v653
    %v657 = vor.u32 %v655, %v656
    %v658 = vshll.u32 2475754826, %v652
    %v659 = vshrl.u32 2131351028, %v653
    %v660 = vor.u32 %v658, %v659
    %v661 = vshll.u32 2131351028, %v652
    %v662 = vshrl.u32 2102212464, %v653
    %v663 = vor.u32 %v661, %v662
    %v664 = vshll.u32 2102212464, %v652
    %v665 = vshrl.u32 920167782, %v653
    %v666 = vor.u32 %v664, %v665
    %v667 = vshll.u32 920167782, %v652
    %v668 = vshrl.u32 1326507024, %v653
    %v669 = vor.u32 %v667, %v668
    %vm670 = vcmp.lt.s32.totalorder %v651, 1
    %vm671 = vcmp.lt.s32.totalorder %v651, 2
    %vm672 = vcmp.lt.s32.totalorder %v651, 3
    %vm673 = vcmp.lt.s32.totalorder %v651, 4
    %v674 = vsel %vm670, %v654, %v657
    %v675 = vsel %vm673, %v663, 2102212464
    %v676 = vsel %vm672, %v660, %v675
    %v677 = vsel %vm671, %v674, %v676
    %v678 = vsel %vm670, %v657, %v660
    %v679 = vsel %vm673, %v666, 920167782
    %v680 = vsel %vm672, %v663, %v679
    %v681 = vsel %vm671, %v678, %v680
    %v682 = vsel %vm670, %v660, %v663
    %v683 = vsel %vm673, %v669, 1326507024
    %v684 = vsel %vm672, %v666, %v683
    %v685 = vsel %vm671, %v682, %v684
    %v686 = vshll.u32 %v646, 8
    %v687 = vand.u32 %v686, 65535
    %v688 = vshrl.u32 %v686, 16
    %v689 = vand.u32 %v685, 65535
    %v690 = vshrl.u32 %v685, 16
    %v691 = vmul.u32 %v687, %v689
    %v692 = vmul.u32 %v687, %v690
    %v693 = vmul.u32 %v688, %v689
    %v694 = vmul.u32 %v688, %v690
    %v695 = vshll.u32 %v692, 16
    %v696 = vshrl.u32 %v692, 16
    %v697 = vshll.u32 %v693, 16
    %v698 = vshrl.u32 %v693, 16
    %vm699 = vc.u32 %v691, %v695
    %v700 = vsel %vm699, 1, 0
    %v701 = vadd.s32 %v691, %v695
    %v702 = vadd.s32 %v694, %v700
    %vm703 = vc.u32 %v701, %v697
    %v704 = vsel %vm703, 1, 0
    %v705 = vadd.s32 %v701, %v697
    %v706 = vadd.s32 %v702, %v704
    %v707 = vadd.s32 %v706, %v696
    %v708 = vadd.s32 %v707, %v698
    %v709 = vand.u32 %v686, 65535
    %v710 = vshrl.u32 %v686, 16
    %v711 = vand.u32 %v681, 65535
    %v712 = vshrl.u32 %v681, 16
    %v713 = vmul.u32 %v709, %v711
    %v714 = vmul.u32 %v709, %v712
    %v715 = vmul.u32 %v710, %v711
    %v716 = vmul.u32 %v710, %v712
    %v717 = vshll.u32 %v714, 16
    %v718 = vshrl.u32 %v714, 16
    %v719 = vshll.u32 %v715, 16
    %v720 = vshrl.u32 %v715, 16
    %vm721 = vc.u32 %v713, %v717
    %v722 = vsel %vm721, 1, 0
    %v723 = vadd.s32 %v713, %v717
    %v724 = vadd.s32 %v716, %v722
    %vm725 = vc.u32 %v723, %v719
    %v726 = vsel %vm725, 1, 0
    %v727 = vadd.s32 %v723, %v719
    %v728 = vadd.s32 %v724, %v726
    %v729 = vadd.s32 %v728, %v718
    %v730 = vadd.s32 %v729, %v720
    %v731 = vmul.u32 %v686, %v677
    %v732 = vadd.s32 %v708, %v727
    %vm733 = vc.u32 %v708, %v727
    %v734 = vadd.s32 %v730, 1
    %v735 = vsel %vm733, %v734, %v730
    %v736 = vadd.s32 %v731, %v735
    %v737 = vadd.s32 %v736, 536870912
    %v738 = vshrl.u32 %v737, 30
    %v739 = vshll.u32 %v738, 30
    %v740 = vsub.s32 %v736, %v739
    %vm741 = vcmp.lt.s32.totalorder %v740, 0
    %v742 = vsub.s32 0, %v740
    %v743 = vsel %vm741, %v742, %v740
    %v744 = vclz %v743
    %v745 = vsub.s32 %v744, 2
    %vm746 = vcmp.gt.s32.totalorder 0, %v745
    %v747 = vsel %vm746, 0, %v745
    %v748 = vsub.s32 32, %v747
    %v749 = vshll.u32 %v740, %v747
    %v750 = vshrl.u32 %v732, %v748
    %v751 = vor.u32 %v749, %v750
    %v752 = vsub.s32 4294967266, %v747
    %v753 = vadd.s32 %v752, 127
    %v754 = vshll.u32 %v753, 23
    %v755 = vor.u32 4788187, %v754
    %v756 = vand.u32 2147483647, %v755
    %v758 = vcvt.s32.f32 %v751
    %v759 = vmul.f32 %v758, %v756
    %v760 = vxor.u32 %v759, 2147483648
    %v761 = vsel %vm640, %v760, %v759
    %v762 = vsub.s32 4, %v738
    %v763 = vsel %vm640, %v762, %v738
    %v764 = vsel %vm639, %v477, %v761
    %v765 = vsel %vm639, 0, %v763
    %v766 = vmul.f32 %v764, %v764
    %v767 = vmul.f32 %v766, -0.001358992
    %v768 = vadd.f32 %v767, 0.041655596
    %v769 = vmul.f32 %v766, %v768
    %v770 = vadd.f32 %v769, -0.4999988
    %v771 = vmul.f32 %v766, %v770
    %v772 = vadd.f32 1.0, %v771
    %v773 = vmul.f32 %v764, %v764
    %v774 = vmul.f32 %v773, -0.00019511016
    %v775 = vadd.f32 %v774, 0.008332121
    %v776 = vmul.f32 %v773, %v775
    %v777 = vadd.f32 %v776, -0.16666654
    %v778 = vmul.f32 %v773, %v777
    %v779 = vadd.f32 %v778, 1.0
    %v780 = vmul.f32 %v779, %v764
    %vm781 = vweird.f32 %v477
    %v782 = vand.u32 %v765, 3
    %vm783 = vcmp.lt.s32.totalorder %v782, 2
    %vm784 = vcmp.eq.s32.totalorder %v782, 0
    %v785 = vxor.u32 %v780, 2147483648
    %v786 = vsel %vm784, %v772, %v785
    %vm787 = vcmp.eq.s32.totalorder %v782, 2
    %v788 = vxor.u32 %v772, 2147483648
    %v789 = vsel %vm787, %v788, %v780
    %v790 = vsel %vm783, %v786, %v789
    %v791 = vsel %vm781, nan, %v790
    %v792 = vand.u32 2147483647, %v478
    %vm793 = vcmp.le.f32.partialorder %v792, 0.7853982
    %vm794 = vcmp.lt.s32.totalorder %v478, 0
    %v795 = vand.u32 %v478, 2139095040
    %v796 = vshrl.u32 %v795, 23
    %v797 = vsub.s32 %v796, 127
    %v798 = vand.u32 2147483647, %v478
    %v799 = vand.u32 %v798, 8388607
    %v800 = vor.u32 %v799, 8388608
    %v801 = vsub.s32 0, %v800
    %v802 = vadd.s32 %v797, 1
    %vm803 = vcmp.gt.s32.totalorder %v802, 0
    %v804 = vsel %vm803, %v802, 0
    %v805 = vshrl.u32 %v804, 5
    %v806 = vand.u32 %v804, 31
    %v807 = vsub.s32 32, %v806
    %v808 = vshrl.u32 683565275, %v807
    %v809 = vshll.u32 683565275, %v806
    %v810 = vshrl.u32 2475754826, %v807
    %v811 = vor.u32 %v809, %v810
    %v812 = vshll.u32 2475754826, %v806
    %v813 = vshrl.u32 2131351028, %v807
    %v814 = vor.u32 %v812, %v813
    %v815 = vshll.u32 2131351028, %v806
    %v816 = vshrl.u32 2102212464, %v807
    %v817 = vor.u32 %v815, %v816
    %v818 = vshll.u32 2102212464, %v806
    %v819 = vshrl.u32 920167782, %v807
    %v820 = vor.u32 %v818, %v819
    %v821 = vshll.u32 920167782, %v806
    %v822 = vshrl.u32 1326507024, %v807
    %v823 = vor.u32 %v821, %v822
    %vm824 = vcmp.lt.s32.totalorder %v805, 1
    %vm825 = vcmp.lt.s32.totalorder %v805, 2
    %vm826 = vcmp.lt.s32.totalorder %v805, 3
    %vm827 = vcmp.lt.s32.totalorder %v805, 4
    %v828 = vsel %vm824, %v808, %v811
    %v829 = vsel %vm827, %v817, 2102212464
    %v830 = vsel %vm826, %v814, %v829
    %v831 = vsel %vm825, %v828, %v830
    %v832 = vsel %vm824, %v811, %v814
    %v833 = vsel %vm827, %v820, 920167782
    %v834 = vsel %vm826, %v817, %v833
    %v835 = vsel %vm825, %v832, %v834
    %v836 = vsel %vm824, %v814, %v817
    %v837 = vsel %vm827, %v823, 1326507024
    %v838 = vsel %vm826, %v820, %v837
    %v839 = vsel %vm825, %v836, %v838
    %v840 = vshll.u32 %v800, 8
    %v841 = vand.u32 %v840, 65535
    %v842 = vshrl.u32 %v840, 16
    %v843 = vand.u32 %v839, 65535
    %v844 = vshrl.u32 %v839, 16
    %v845 = vmul.u32 %v841, %v843
    %v846 = vmul.u32 %v841, %v844
    %v847 = vmul.u32 %v842, %v843
    %v848 = vmul.u32 %v842, %v844
    %v849 = vshll.u32 %v846, 16
    %v850 = vshrl.u32 %v846, 16
    %v851 = vshll.u32 %v847, 16
    %v852 = vshrl.u32 %v847, 16
    %vm853 = vc.u32 %v845, %v849
    %v854 = vsel %vm853, 1, 0
    %v855 = vadd.s32 %v845, %v849
    %v856 = vadd.s32 %v848, %v854
    %vm857 = vc.u32 %v855, %v851
    %v858 = vsel %vm857, 1, 0
    %v859 = vadd.s32 %v855, %v851
    %v860 = vadd.s32 %v856, %v858
    %v861 = vadd.s32 %v860, %v850
    %v862 = vadd.s32 %v861, %v852
    %v863 = vand.u32 %v840, 65535
    %v864 = vshrl.u32 %v840, 16
    %v865 = vand.u32 %v835, 65535
    %v866 = vshrl.u32 %v835, 16
    %v867 = vmul.u32 %v863, %v865
    %v868 = vmul.u32 %v863, %v866
    %v869 = vmul.u32 %v864, %v865
    %v870 = vmul.u32 %v864, %v866
    %v871 = vshll.u32 %v868, 16
    %v872 = vshrl.u32 %v868, 16
    %v873 = vshll.u32 %v869, 16
    %v874 = vshrl.u32 %v869, 16
    %vm875 = vc.u32 %v867, %v871
    %v876 = vsel %vm875, 1, 0
    %v877 = vadd.s32 %v867, %v871
    %v878 = vadd.s32 %v870, %v876
    %vm879 = vc.u32 %v877, %v873
    %v880 = vsel %vm879, 1, 0
    %v881 = vadd.s32 %v877, %v873
    %v882 = vadd.s32 %v878, %v880
    %v883 = vadd.s32 %v882, %v872
    %v884 = vadd.s32 %v883, %v874
    %v885 = vmul.u32 %v840, %v831
    %v886 = vadd.s32 %v862, %v881
    %vm887 = vc.u32 %v862, %v881
    %v888 = vadd.s32 %v884, 1
    %v889 = vsel %vm887, %v888, %v884
    %v890 = vadd.s32 %v885, %v889
    %v891 = vadd.s32 %v890, 536870912
    %v892 = vshrl.u32 %v891, 30
    %v893 = vshll.u32 %v892, 30
    %v894 = vsub.s32 %v890, %v893
    %vm895 = vcmp.lt.s32.totalorder %v894, 0
    %v896 = vsub.s32 0, %v894
    %v897 = vsel %vm895, %v896, %v894
    %v898 = vclz %v897
    %v899 = vsub.s32 %v898, 2
    %vm900 = vcmp.gt.s32.totalorder 0, %v899
    %v901 = vsel %vm900, 0, %v899
    %v902 = vsub.s32 32, %v901
    %v903 = vshll.u32 %v894, %v901
    %v904 = vshrl.u32 %v886, %v902
    %v905 = vor.u32 %v903, %v904
    %v906 = vsub.s32 4294967266, %v901
    %v907 = vadd.s32 %v906, 127
    %v908 = vshll.u32 %v907, 23
    %v909 = vor.u32 4788187, %v908
    %v910 = vand.u32 2147483647, %v909
    %v912 = vcvt.s32.f32 %v905
    %v913 = vmul.f32 %v912, %v910
    %v914 = vxor.u32 %v913, 2147483648
    %v915 = vsel %vm794, %v914, %v913
    %v916 = vsub.s32 4, %v892
    %v917 = vsel %vm794, %v916, %v892
    %v918 = vsel %vm793, %v478, %v915
    %v919 = vsel %vm793, 0, %v917
    %v920 = vmul.f32 %v918, %v918
    %v921 = vmul.f32 %v920, -0.001358992
    %v922 = vadd.f32 %v921, 0.041655596
    %v923 = vmul.f32 %v920, %v922
    %v924 = vadd.f32 %v923, -0.4999988
    %v925 = vmul.f32 %v920, %v924
    %v926 = vadd.f32 1.0, %v925
    %v927 = vmul.f32 %v918, %v918
    %v928 = vmul.f32 %v927, -0.00019511016
    %v929 = vadd.f32 %v928, 0.008332121
    %v930 = vmul.f32 %v927, %v929
    %v931 = vadd.f32 %v930, -0.16666654
    %v932 = vmul.f32 %v927, %v931
    %v933 = vadd.f32 %v932, 1.0
    %v934 = vmul.f32 %v933, %v918
    %vm935 = vweird.f32 %v478
    %v936 = vand.u32 %v919, 3
    %vm937 = vcmp.lt.s32.totalorder %v936, 2
    %vm938 = vcmp.eq.s32.totalorder %v936, 0
    %v939 = vxor.u32 %v934, 2147483648
    %v940 = vsel %vm938, %v926, %v939
    %vm941 = vcmp.eq.s32.totalorder %v936, 2
    %v942 = vxor.u32 %v926, 2147483648
    %v943 = vsel %vm941, %v942, %v934
    %v944 = vsel %vm937, %v940, %v943
    %v945 = vsel %vm935, nan, %v944
    %v946 = vand.u32 2147483647, %v479
    %vm947 = vcmp.le.f32.partialorder %v946, 0.7853982
    %vm948 = vcmp.lt.s32.totalorder %v479, 0
    %v949 = vand.u32 %v479, 2139095040
    %v950 = vshrl.u32 %v949, 23
    %v951 = vsub.s32 %v950, 127
    %v952 = vand.u32 2147483647, %v479
    %v953 = vand.u32 %v952, 8388607
    %v954 = vor.u32 %v953, 8388608
    %v955 = vsub.s32 0, %v954
    %v956 = vadd.s32 %v951, 1
    %vm957 = vcmp.gt.s32.totalorder %v956, 0
    %v958 = vsel %vm957, %v956, 0
    %v959 = vshrl.u32 %v958, 5
    %v960 = vand.u32 %v958, 31
    %v961 = vsub.s32 32, %v960
    %v962 = vshrl.u32 683565275, %v961
    %v963 = vshll.u32 683565275, %v960
    %v964 = vshrl.u32 2475754826, %v961
    %v965 = vor.u32 %v963, %v964
    %v966 = vshll.u32 2475754826, %v960
    %v967 = vshrl.u32 2131351028, %v961
    %v968 = vor.u32 %v966, %v967
    %v969 = vshll.u32 2131351028, %v960
    %v970 = vshrl.u32 2102212464, %v961
    %v971 = vor.u32 %v969, %v970
    %v972 = vshll.u32 2102212464, %v960
    %v973 = vshrl.u32 920167782, %v961
    %v974 = vor.u32 %v972, %v973
    %v975 = vshll.u32 920167782, %v960
    %v976 = vshrl.u32 1326507024, %v961
    %v977 = vor.u32 %v975, %v976
    %vm978 = vcmp.lt.s32.totalorder %v959, 1
    %vm979 = vcmp.lt.s32.totalorder %v959, 2
    %vm980 = vcmp.lt.s32.totalorder %v959, 3
    %vm981 = vcmp.lt.s32.totalorder %v959, 4
    %v982 = vsel %vm978, %v962, %v965
    %v983 = vsel %vm981, %v971, 2102212464
    %v984 = vsel %vm980, %v968, %v983
    %v985 = vsel %vm979, %v982, %v984
    %v986 = vsel %vm978, %v965, %v968
    %v987 = vsel %vm981, %v974, 920167782
    %v988 = vsel %vm980, %v971, %v987
    %v989 = vsel %vm979, %v986, %v988
    %v990 = vsel %vm978, %v968, %v971
    %v991 = vsel %vm981, %v977, 1326507024
    %v992 = vsel %vm980, %v974, %v991
    %v993 = vsel %vm979, %v990, %v992
    %v994 = vshll.u32 %v954, 8
    %v995 = vand.u32 %v994, 65535
    %v996 = vshrl.u32 %v994, 16
    %v997 = vand.u32 %v993, 65535
    %v998 = vshrl.u32 %v993, 16
    %v999 = vmul.u32 %v995, %v997
    %v1000 = vmul.u32 %v995, %v998
    %v1001 = vmul.u32 %v996, %v997
    %v1002 = vmul.u32 %v996, %v998
    %v1003 = vshll.u32 %v1000, 16
    %v1004 = vshrl.u32 %v1000, 16
    %v1005 = vshll.u32 %v1001, 16
    %v1006 = vshrl.u32 %v1001, 16
    %vm1007 = vc.u32 %v999, %v1003
    %v1008 = vsel %vm1007, 1, 0
    %v1009 = vadd.s32 %v999, %v1003
    %v1010 = vadd.s32 %v1002, %v1008
    %vm1011 = vc.u32 %v1009, %v1005
    %v1012 = vsel %vm1011, 1, 0
    %v1013 = vadd.s32 %v1009, %v1005
    %v1014 = vadd.s32 %v1010, %v1012
    %v1015 = vadd.s32 %v1014, %v1004
    %v1016 = vadd.s32 %v1015, %v1006
    %v1017 = vand.u32 %v994, 65535
    %v1018 = vshrl.u32 %v994, 16
    %v1019 = vand.u32 %v989, 65535
    %v1020 = vshrl.u32 %v989, 16
    %v1021 = vmul.u32 %v1017, %v1019
    %v1022 = vmul.u32 %v1017, %v1020
    %v1023 = vmul.u32 %v1018, %v1019
    %v1024 = vmul.u32 %v1018, %v1020
    %v1025 = vshll.u32 %v1022, 16
    %v1026 = vshrl.u32 %v1022, 16
    %v1027 = vshll.u32 %v1023, 16
    %v1028 = vshrl.u32 %v1023, 16
    %vm1029 = vc.u32 %v1021, %v1025
    %v1030 = vsel %vm1029, 1, 0
    %v1031 = vadd.s32 %v1021, %v1025
    %v1032 = vadd.s32 %v1024, %v1030
    %vm1033 = vc.u32 %v1031, %v1027
    %v1034 = vsel %vm1033, 1, 0
    %v1035 = vadd.s32 %v1031, %v1027
    %v1036 = vadd.s32 %v1032, %v1034
    %v1037 = vadd.s32 %v1036, %v1026
    %v1038 = vadd.s32 %v1037, %v1028
    %v1039 = vmul.u32 %v994, %v985
    %v1040 = vadd.s32 %v1016, %v1035
    %vm1041 = vc.u32 %v1016, %v1035
    %v1042 = vadd.s32 %v1038, 1
    %v1043 = vsel %vm1041, %v1042, %v1038
    %v1044 = vadd.s32 %v1039, %v1043
    %v1045 = vadd.s32 %v1044, 536870912
    %v1046 = vshrl.u32 %v1045, 30
    %v1047 = vshll.u32 %v1046, 30
    %v1048 = vsub.s32 %v1044, %v1047
    %vm1049 = vcmp.lt.s32.totalorder %v1048, 0
    %v1050 = vsub.s32 0, %v1048
    %v1051 = vsel %vm1049, %v1050, %v1048
    %v1052 = vclz %v1051
    %v1053 = vsub.s32 %v1052, 2
    %vm1054 = vcmp.gt.s32.totalorder 0, %v1053
    %v1055 = vsel %vm1054, 0, %v1053
    %v1056 = vsub.s32 32, %v1055
    %v1057 = vshll.u32 %v1048, %v1055
    %v1058 = vshrl.u32 %v1040, %v1056
    %v1059 = vor.u32 %v1057, %v1058
    %v1060 = vsub.s32 4294967266, %v1055
    %v1061 = vadd.s32 %v1060, 127
    %v1062 = vshll.u32 %v1061, 23
    %v1063 = vor.u32 4788187, %v1062
    %v1064 = vand.u32 2147483647, %v1063
    %v1066 = vcvt.s32.f32 %v1059
    %v1067 = vmul.f32 %v1066, %v1064
    %v1068 = vxor.u32 %v1067, 2147483648
    %v1069 = vsel %vm948, %v1068, %v1067
    %v1070 = vsub.s32 4, %v1046
    %v1071 = vsel %vm948, %v1070, %v1046
    %v1072 = vsel %vm947, %v479, %v1069
    %v1073 = vsel %vm947, 0, %v1071
    %v1074 = vmul.f32 %v1072, %v1072
    %v1075 = vmul.f32 %v1074, -0.001358992
    %v1076 = vadd.f32 %v1075, 0.041655596
    %v1077 = vmul.f32 %v1074, %v1076
    %v1078 = vadd.f32 %v1077, -0.4999988
    %v1079 = vmul.f32 %v1074, %v1078
    %v1080 = vadd.f32 1.0, %v1079
    %v1081 = vmul.f32 %v1072, %v1072
    %v1082 = vmul.f32 %v1081, -0.00019511016
    %v1083 = vadd.f32 %v1082, 0.008332121
    %v1084 = vmul.f32 %v1081, %v1083
    %v1085 = vadd.f32 %v1084, -0.16666654
    %v1086 = vmul.f32 %v1081, %v1085
    %v1087 = vadd.f32 %v1086, 1.0
    %v1088 = vmul.f32 %v1087, %v1072
    %vm1089 = vweird.f32 %v479
    %v1090 = vand.u32 %v1073, 3
    %vm1091 = vcmp.lt.s32.totalorder %v1090, 2
    %vm1092 = vcmp.eq.s32.totalorder %v1090, 0
    %v1093 = vxor.u32 %v1088, 2147483648
    %v1094 = vsel %vm1092, %v1080, %v1093
    %vm1095 = vcmp.eq.s32.totalorder %v1090, 2
    %v1096 = vxor.u32 %v1080, 2147483648
    %v1097 = vsel %vm1095, %v1096, %v1088
    %v1098 = vsel %vm1091, %v1094, %v1097
    %v1099 = vsel %vm1089, nan, %v1098
    %v1100 = vand.u32 2147483647, %v480
    %vm1101 = vcmp.le.f32.partialorder %v1100, 0.7853982
    %vm1102 = vcmp.lt.s32.totalorder %v480, 0
    %v1103 = vand.u32 %v480, 2139095040
    %v1104 = vshrl.u32 %v1103, 23
    %v1105 = vsub.s32 %v1104, 127
    %v1106 = vand.u32 2147483647, %v480
    %v1107 = vand.u32 %v1106, 8388607
    %v1108 = vor.u32 %v1107, 8388608
    %v1109 = vsub.s32 0, %v1108
    %v1110 = vadd.s32 %v1105, 1
    %vm1111 = vcmp.gt.s32.totalorder %v1110, 0
    %v1112 = vsel %vm1111, %v1110, 0
    %v1113 = vshrl.u32 %v1112, 5
    %v1114 = vand.u32 %v1112, 31
    %v1115 = vsub.s32 32, %v1114
    %v1116 = vshrl.u32 683565275, %v1115
    %v1117 = vshll.u32 683565275, %v1114
    %v1118 = vshrl.u32 2475754826, %v1115
    %v1119 = vor.u32 %v1117, %v1118
    %v1120 = vshll.u32 2475754826, %v1114
    %v1121 = vshrl.u32 2131351028, %v1115
    %v1122 = vor.u32 %v1120, %v1121
    %v1123 = vshll.u32 2131351028, %v1114
    %v1124 = vshrl.u32 2102212464, %v1115
    %v1125 = vor.u32 %v1123, %v1124
    %v1126 = vshll.u32 2102212464, %v1114
    %v1127 = vshrl.u32 920167782, %v1115
    %v1128 = vor.u32 %v1126, %v1127
    %v1129 = vshll.u32 920167782, %v1114
    %v1130 = vshrl.u32 1326507024, %v1115
    %v1131 = vor.u32 %v1129, %v1130
    %vm1132 = vcmp.lt.s32.totalorder %v1113, 1
    %vm1133 = vcmp.lt.s32.totalorder %v1113, 2
    %vm1134 = vcmp.lt.s32.totalorder %v1113, 3
    %vm1135 = vcmp.lt.s32.totalorder %v1113, 4
    %v1136 = vsel %vm1132, %v1116, %v1119
    %v1137 = vsel %vm1135, %v1125, 2102212464
    %v1138 = vsel %vm1134, %v1122, %v1137
    %v1139 = vsel %vm1133, %v1136, %v1138
    %v1140 = vsel %vm1132, %v1119, %v1122
    %v1141 = vsel %vm1135, %v1128, 920167782
    %v1142 = vsel %vm1134, %v1125, %v1141
    %v1143 = vsel %vm1133, %v1140, %v1142
    %v1144 = vsel %vm1132, %v1122, %v1125
    %v1145 = vsel %vm1135, %v1131, 1326507024
    %v1146 = vsel %vm1134, %v1128, %v1145
    %v1147 = vsel %vm1133, %v1144, %v1146
    %v1148 = vshll.u32 %v1108, 8
    %v1149 = vand.u32 %v1148, 65535
    %v1150 = vshrl.u32 %v1148, 16
    %v1151 = vand.u32 %v1147, 65535
    %v1152 = vshrl.u32 %v1147, 16
    %v1153 = vmul.u32 %v1149, %v1151
    %v1154 = vmul.u32 %v1149, %v1152
    %v1155 = vmul.u32 %v1150, %v1151
    %v1156 = vmul.u32 %v1150, %v1152
    %v1157 = vshll.u32 %v1154, 16
    %v1158 = vshrl.u32 %v1154, 16
    %v1159 = vshll.u32 %v1155, 16
    %v1160 = vshrl.u32 %v1155, 16
    %vm1161 = vc.u32 %v1153, %v1157
    %v1162 = vsel %vm1161, 1, 0
    %v1163 = vadd.s32 %v1153, %v1157
    %v1164 = vadd.s32 %v1156, %v1162
    %vm1165 = vc.u32 %v1163, %v1159
    %v1166 = vsel %vm1165, 1, 0
    %v1167 = vadd.s32 %v1163, %v1159
    %v1168 = vadd.s32 %v1164, %v1166
    %v1169 = vadd.s32 %v1168, %v1158
    %v1170 = vadd.s32 %v1169, %v1160
    %v1171 = vand.u32 %v1148, 65535
    %v1172 = vshrl.u32 %v1148, 16
    %v1173 = vand.u32 %v1143, 65535
    %v1174 = vshrl.u32 %v1143, 16
    %v1175 = vmul.u32 %v1171, %v1173
    %v1176 = vmul.u32 %v1171, %v1174
    %v1177 = vmul.u32 %v1172, %v1173
    %v1178 = vmul.u32 %v1172, %v1174
    %v1179 = vshll.u32 %v1176, 16
    %v1180 = vshrl.u32 %v1176, 16
    %v1181 = vshll.u32 %v1177, 16
    %v1182 = vshrl.u32 %v1177, 16
    %vm1183 = vc.u32 %v1175, %v1179
    %v1184 = vsel %vm1183, 1, 0
    %v1185 = vadd.s32 %v1175, %v1179
    %v1186 = vadd.s32 %v1178, %v1184
    %vm1187 = vc.u32 %v1185, %v1181
    %v1188 = vsel %vm1187, 1, 0
    %v1189 = vadd.s32 %v1185, %v1181
    %v1190 = vadd.s32 %v1186, %v1188
    %v1191 = vadd.s32 %v1190, %v1180
    %v1192 = vadd.s32 %v1191, %v1182
    %v1193 = vmul.u32 %v1148, %v1139
    %v1194 = vadd.s32 %v1170, %v1189
    %vm1195 = vc.u32 %v1170, %v1189
    %v1196 = vadd.s32 %v1192, 1
    %v1197 = vsel %vm1195, %v1196, %v1192
    %v1198 = vadd.s32 %v1193, %v1197
    %v1199 = vadd.s32 %v1198, 536870912
    %v1200 = vshrl.u32 %v1199, 30
    %v1201 = vshll.u32 %v1200, 30
    %v1202 = vsub.s32 %v1198, %v1201
    %vm1203 = vcmp.lt.s32.totalorder %v1202, 0
    %v1204 = vsub.s32 0, %v1202
    %v1205 = vsel %vm1203, %v1204, %v1202
    %v1206 = vclz %v1205
    %v1207 = vsub.s32 %v1206, 2
    %vm1208 = vcmp.gt.s32.totalorder 0, %v1207
    %v1209 = vsel %vm1208, 0, %v1207
    %v1210 = vsub.s32 32, %v1209
    %v1211 = vshll.u32 %v1202, %v1209
    %v1212 = vshrl.u32 %v1194, %v1210
    %v1213 = vor.u32 %v1211, %v1212
    %v1214 = vsub.s32 4294967266, %v1209
    %v1215 = vadd.s32 %v1214, 127
    %v1216 = vshll.u32 %v1215, 23
    %v1217 = vor.u32 4788187, %v1216
    %v1218 = vand.u32 2147483647, %v1217
    %v1220 = vcvt.s32.f32 %v1213
    %v1221 = vmul.f32 %v1220, %v1218
    %v1222 = vxor.u32 %v1221, 2147483648
    %v1223 = vsel %vm1102, %v1222, %v1221
    %v1224 = vsub.s32 4, %v1200
    %v1225 = vsel %vm1102, %v1224, %v1200
    %v1226 = vsel %vm1101, %v480, %v1223
    %v1227 = vsel %vm1101, 0, %v1225
    %v1228 = vmul.f32 %v1226, %v1226
    %v1229 = vmul.f32 %v1228, -0.001358992
    %v1230 = vadd.f32 %v1229, 0.041655596
    %v1231 = vmul.f32 %v1228, %v1230
    %v1232 = vadd.f32 %v1231, -0.4999988
    %v1233 = vmul.f32 %v1228, %v1232
    %v1234 = vadd.f32 1.0, %v1233
    %v1235 = vmul.f32 %v1226, %v1226
    %v1236 = vmul.f32 %v1235, -0.00019511016
    %v1237 = vadd.f32 %v1236, 0.008332121
    %v1238 = vmul.f32 %v1235, %v1237
    %v1239 = vadd.f32 %v1238, -0.16666654
    %v1240 = vmul.f32 %v1235, %v1239
    %v1241 = vadd.f32 %v1240, 1.0
    %v1242 = vmul.f32 %v1241, %v1226
    %vm1243 = vweird.f32 %v480
    %v1244 = vand.u32 %v1227, 3
    %vm1245 = vcmp.lt.s32.totalorder %v1244, 2
    %vm1246 = vcmp.eq.s32.totalorder %v1244, 0
    %v1247 = vxor.u32 %v1242, 2147483648
    %v1248 = vsel %vm1246, %v1234, %v1247
    %vm1249 = vcmp.eq.s32.totalorder %v1244, 2
    %v1250 = vxor.u32 %v1234, 2147483648
    %v1251 = vsel %vm1249, %v1250, %v1242
    %v1252 = vsel %vm1245, %v1248, %v1251
    %v1253 = vsel %vm1243, nan, %v1252
    %v1254 = vand.u32 2147483647, %v481
    %vm1255 = vcmp.le.f32.partialorder %v1254, 0.7853982
    %vm1256 = vcmp.lt.s32.totalorder %v481, 0
    %v1257 = vand.u32 %v481, 2139095040
    %v1258 = vshrl.u32 %v1257, 23
    %v1259 = vsub.s32 %v1258, 127
    %v1260 = vand.u32 2147483647, %v481
    %v1261 = vand.u32 %v1260, 8388607
    %v1262 = vor.u32 %v1261, 8388608
    %v1263 = vsub.s32 0, %v1262
    %v1264 = vadd.s32 %v1259, 1
    %vm1265 = vcmp.gt.s32.totalorder %v1264, 0
    %v1266 = vsel %vm1265, %v1264, 0
    %v1267 = vshrl.u32 %v1266, 5
    %v1268 = vand.u32 %v1266, 31
    %v1269 = vsub.s32 32, %v1268
    %v1270 = vshrl.u32 683565275, %v1269
    %v1271 = vshll.u32 683565275, %v1268
    %v1272 = vshrl.u32 2475754826, %v1269
    %v1273 = vor.u32 %v1271, %v1272
    %v1274 = vshll.u32 2475754826, %v1268
    %v1275 = vshrl.u32 2131351028, %v1269
    %v1276 = vor.u32 %v1274, %v1275
    %v1277 = vshll.u32 2131351028, %v1268
    %v1278 = vshrl.u32 2102212464, %v1269
    %v1279 = vor.u32 %v1277, %v1278
    %v1280 = vshll.u32 2102212464, %v1268
    %v1281 = vshrl.u32 920167782, %v1269
    %v1282 = vor.u32 %v1280, %v1281
    %v1283 = vshll.u32 920167782, %v1268
    %v1284 = vshrl.u32 1326507024, %v1269
    %v1285 = vor.u32 %v1283, %v1284
    %vm1286 = vcmp.lt.s32.totalorder %v1267, 1
    %vm1287 = vcmp.lt.s32.totalorder %v1267, 2
    %vm1288 = vcmp.lt.s32.totalorder %v1267, 3
    %vm1289 = vcmp.lt.s32.totalorder %v1267, 4
    %v1290 = vsel %vm1286, %v1270, %v1273
    %v1291 = vsel %vm1289, %v1279, 2102212464
    %v1292 = vsel %vm1288, %v1276, %v1291
    %v1293 = vsel %vm1287, %v1290, %v1292
    %v1294 = vsel %vm1286, %v1273, %v1276
    %v1295 = vsel %vm1289, %v1282, 920167782
    %v1296 = vsel %vm1288, %v1279, %v1295
    %v1297 = vsel %vm1287, %v1294, %v1296
    %v1298 = vsel %vm1286, %v1276, %v1279
    %v1299 = vsel %vm1289, %v1285, 1326507024
    %v1300 = vsel %vm1288, %v1282, %v1299
    %v1301 = vsel %vm1287, %v1298, %v1300
    %v1302 = vshll.u32 %v1262, 8
    %v1303 = vand.u32 %v1302, 65535
    %v1304 = vshrl.u32 %v1302, 16
    %v1305 = vand.u32 %v1301, 65535
    %v1306 = vshrl.u32 %v1301, 16
    %v1307 = vmul.u32 %v1303, %v1305
    %v1308 = vmul.u32 %v1303, %v1306
    %v1309 = vmul.u32 %v1304, %v1305
    %v1310 = vmul.u32 %v1304, %v1306
    %v1311 = vshll.u32 %v1308, 16
    %v1312 = vshrl.u32 %v1308, 16
    %v1313 = vshll.u32 %v1309, 16
    %v1314 = vshrl.u32 %v1309, 16
    %vm1315 = vc.u32 %v1307, %v1311
    %v1316 = vsel %vm1315, 1, 0
    %v1317 = vadd.s32 %v1307, %v1311
    %v1318 = vadd.s32 %v1310, %v1316
    %vm1319 = vc.u32 %v1317, %v1313
    %v1320 = vsel %vm1319, 1, 0
    %v1321 = vadd.s32 %v1317, %v1313
    %v1322 = vadd.s32 %v1318, %v1320
    %v1323 = vadd.s32 %v1322, %v1312
    %v1324 = vadd.s32 %v1323, %v1314
    %v1325 = vand.u32 %v1302, 65535
    %v1326 = vshrl.u32 %v1302, 16
    %v1327 = vand.u32 %v1297, 65535
    %v1328 = vshrl.u32 %v1297, 16
    %v1329 = vmul.u32 %v1325, %v1327
    %v1330 = vmul.u32 %v1325, %v1328
    %v1331 = vmul.u32 %v1326, %v1327
    %v1332 = vmul.u32 %v1326, %v1328
    %v1333 = vshll.u32 %v1330, 16
    %v1334 = vshrl.u32 %v1330, 16
    %v1335 = vshll.u32 %v1331, 16
    %v1336 = vshrl.u32 %v1331, 16
    %vm1337 = vc.u32 %v1329, %v1333
    %v1338 = vsel %vm1337, 1, 0
    %v1339 = vadd.s32 %v1329, %v1333
    %v1340 = vadd.s32 %v1332, %v1338
    %vm1341 = vc.u32 %v1339, %v1335
    %v1342 = vsel %vm1341, 1, 0
    %v1343 = vadd.s32 %v1339, %v1335
    %v1344 = vadd.s32 %v1340, %v1342
    %v1345 = vadd.s32 %v1344, %v1334
    %v1346 = vadd.s32 %v1345, %v1336
    %v1347 = vmul.u32 %v1302, %v1293
    %v1348 = vadd.s32 %v1324, %v1343
    %vm1349 = vc.u32 %v1324, %v1343
    %v1350 = vadd.s32 %v1346, 1
    %v1351 = vsel %vm1349, %v1350, %v1346
    %v1352 = vadd.s32 %v1347, %v1351
    %v1353 = vadd.s32 %v1352, 536870912
    %v1354 = vshrl.u32 %v1353, 30
    %v1355 = vshll.u32 %v1354, 30
    %v1356 = vsub.s32 %v1352, %v1355
    %vm1357 = vcmp.lt.s32.totalorder %v1356, 0
    %v1358 = vsub.s32 0, %v1356
    %v1359 = vsel %vm1357, %v1358, %v1356
    %v1360 = vclz %v1359
    %v1361 = vsub.s32 %v1360, 2
    %vm1362 = vcmp.gt.s32.totalorder 0, %v1361
    %v1363 = vsel %vm1362, 0, %v1361
    %v1364 = vsub.s32 32, %v1363
    %v1365 = vshll.u32 %v1356, %v1363
    %v1366 = vshrl.u32 %v1348, %v1364
    %v1367 = vor.u32 %v1365, %v1366
    %v1368 = vsub.s32 4294967266, %v1363
    %v1369 = vadd.s32 %v1368, 127
    %v1370 = vshll.u32 %v1369, 23
    %v1371 = vor.u32 4788187, %v1370
    %v1372 = vand.u32 2147483647, %v1371
    %v1374 = vcvt.s32.f32 %v1367
    %v1375 = vmul.f32 %v1374, %v1372
    %v1376 = vxor.u32 %v1375, 2147483648
    %v1377 = vsel %vm1256, %v1376, %v1375
    %v1378 = vsub.s32 4, %v1354
    %v1379 = vsel %vm1256, %v1378, %v1354
    %v1380 = vsel %vm1255, %v481, %v1377
    %v1381 = vsel %vm1255, 0, %v1379
    %v1382 = vmul.f32 %v1380, %v1380
    %v1383 = vmul.f32 %v1382, -0.001358992
    %v1384 = vadd.f32 %v1383, 0.041655596
    %v1385 = vmul.f32 %v1382, %v1384
    %v1386 = vadd.f32 %v1385, -0.4999988
    %v1387 = vmul.f32 %v1382, %v1386
    %v1388 = vadd.f32 1.0, %v1387
    %v1389 = vmul.f32 %v1380, %v1380
    %v1390 = vmul.f32 %v1389, -0.00019511016
    %v1391 = vadd.f32 %v1390, 0.008332121
    %v1392 = vmul.f32 %v1389, %v1391
    %v1393 = vadd.f32 %v1392, -0.16666654
    %v1394 = vmul.f32 %v1389, %v1393
    %v1395 = vadd.f32 %v1394, 1.0
    %v1396 = vmul.f32 %v1395, %v1380
    %vm1397 = vweird.f32 %v481
    %v1398 = vand.u32 %v1381, 3
    %vm1399 = vcmp.lt.s32.totalorder %v1398, 2
    %vm1400 = vcmp.eq.s32.totalorder %v1398, 0
    %v1401 = vxor.u32 %v1396, 2147483648
    %v1402 = vsel %vm1400, %v1388, %v1401
    %vm1403 = vcmp.eq.s32.totalorder %v1398, 2
    %v1404 = vxor.u32 %v1388, 2147483648
    %v1405 = vsel %vm1403, %v1404, %v1396
    %v1406 = vsel %vm1399, %v1402, %v1405
    %v1407 = vsel %vm1397, nan, %v1406
    %v1408 = vand.u32 2147483647, %v482
    %vm1409 = vcmp.le.f32.partialorder %v1408, 0.7853982
    %vm1410 = vcmp.lt.s32.totalorder %v482, 0
    %v1411 = vand.u32 %v482, 2139095040
    %v1412 = vshrl.u32 %v1411, 23
    %v1413 = vsub.s32 %v1412, 127
    %v1414 = vand.u32 2147483647, %v482
    %v1415 = vand.u32 %v1414, 8388607
    %v1416 = vor.u32 %v1415, 8388608
    %v1417 = vsub.s32 0, %v1416
    %v1418 = vadd.s32 %v1413, 1
    %vm1419 = vcmp.gt.s32.totalorder %v1418, 0
    %v1420 = vsel %vm1419, %v1418, 0
    %v1421 = vshrl.u32 %v1420, 5
    %v1422 = vand.u32 %v1420, 31
    %v1423 = vsub.s32 32, %v1422
    %v1424 = vshrl.u32 683565275, %v1423
    %v1425 = vshll.u32 683565275, %v1422
    %v1426 = vshrl.u32 2475754826, %v1423
    %v1427 = vor.u32 %v1425, %v1426
    %v1428 = vshll.u32 2475754826, %v1422
    %v1429 = vshrl.u32 2131351028, %v1423
    %v1430 = vor.u32 %v1428, %v1429
    %v1431 = vshll.u32 2131351028, %v1422
    %v1432 = vshrl.u32 2102212464, %v1423
    %v1433 = vor.u32 %v1431, %v1432
    %v1434 = vshll.u32 2102212464, %v1422
    %v1435 = vshrl.u32 920167782, %v1423
    %v1436 = vor.u32 %v1434, %v1435
    %v1437 = vshll.u32 920167782, %v1422
    %v1438 = vshrl.u32 1326507024, %v1423
    %v1439 = vor.u32 %v1437, %v1438
    %vm1440 = vcmp.lt.s32.totalorder %v1421, 1
    %vm1441 = vcmp.lt.s32.totalorder %v1421, 2
    %vm1442 = vcmp.lt.s32.totalorder %v1421, 3
    %vm1443 = vcmp.lt.s32.totalorder %v1421, 4
    %v1444 = vsel %vm1440, %v1424, %v1427
    %v1445 = vsel %vm1443, %v1433, 2102212464
    %v1446 = vsel %vm1442, %v1430, %v1445
    %v1447 = vsel %vm1441, %v1444, %v1446
    %v1448 = vsel %vm1440, %v1427, %v1430
    %v1449 = vsel %vm1443, %v1436, 920167782
    %v1450 = vsel %vm1442, %v1433, %v1449
    %v1451 = vsel %vm1441, %v1448, %v1450
    %v1452 = vsel %vm1440, %v1430, %v1433
    %v1453 = vsel %vm1443, %v1439, 1326507024
    %v1454 = vsel %vm1442, %v1436, %v1453
    %v1455 = vsel %vm1441, %v1452, %v1454
    %v1456 = vshll.u32 %v1416, 8
    %v1457 = vand.u32 %v1456, 65535
    %v1458 = vshrl.u32 %v1456, 16
    %v1459 = vand.u32 %v1455, 65535
    %v1460 = vshrl.u32 %v1455, 16
    %v1461 = vmul.u32 %v1457, %v1459
    %v1462 = vmul.u32 %v1457, %v1460
    %v1463 = vmul.u32 %v1458, %v1459
    %v1464 = vmul.u32 %v1458, %v1460
    %v1465 = vshll.u32 %v1462, 16
    %v1466 = vshrl.u32 %v1462, 16
    %v1467 = vshll.u32 %v1463, 16
    %v1468 = vshrl.u32 %v1463, 16
    %vm1469 = vc.u32 %v1461, %v1465
    %v1470 = vsel %vm1469, 1, 0
    %v1471 = vadd.s32 %v1461, %v1465
    %v1472 = vadd.s32 %v1464, %v1470
    %vm1473 = vc.u32 %v1471, %v1467
    %v1474 = vsel %vm1473, 1, 0
    %v1475 = vadd.s32 %v1471, %v1467
    %v1476 = vadd.s32 %v1472, %v1474
    %v1477 = vadd.s32 %v1476, %v1466
    %v1478 = vadd.s32 %v1477, %v1468
    %v1479 = vand.u32 %v1456, 65535
    %v1480 = vshrl.u32 %v1456, 16
    %v1481 = vand.u32 %v1451, 65535
    %v1482 = vshrl.u32 %v1451, 16
    %v1483 = vmul.u32 %v1479, %v1481
    %v1484 = vmul.u32 %v1479, %v1482
    %v1485 = vmul.u32 %v1480, %v1481
    %v1486 = vmul.u32 %v1480, %v1482
    %v1487 = vshll.u32 %v1484, 16
    %v1488 = vshrl.u32 %v1484, 16
    %v1489 = vshll.u32 %v1485, 16
    %v1490 = vshrl.u32 %v1485, 16
    %vm1491 = vc.u32 %v1483, %v1487
    %v1492 = vsel %vm1491, 1, 0
    %v1493 = vadd.s32 %v1483, %v1487
    %v1494 = vadd.s32 %v1486, %v1492
    %vm1495 = vc.u32 %v1493, %v1489
    %v1496 = vsel %vm1495, 1, 0
    %v1497 = vadd.s32 %v1493, %v1489
    %v1498 = vadd.s32 %v1494, %v1496
    %v1499 = vadd.s32 %v1498, %v1488
    %v1500 = vadd.s32 %v1499, %v1490
    %v1501 = vmul.u32 %v1456, %v1447
    %v1502 = vadd.s32 %v1478, %v1497
    %vm1503 = vc.u32 %v1478, %v1497
    %v1504 = vadd.s32 %v1500, 1
    %v1505 = vsel %vm1503, %v1504, %v1500
    %v1506 = vadd.s32 %v1501, %v1505
    %v1507 = vadd.s32 %v1506, 536870912
    %v1508 = vshrl.u32 %v1507, 30
    %v1509 = vshll.u32 %v1508, 30
    %v1510 = vsub.s32 %v1506, %v1509
    %vm1511 = vcmp.lt.s32.totalorder %v1510, 0
    %v1512 = vsub.s32 0, %v1510
    %v1513 = vsel %vm1511, %v1512, %v1510
    %v1514 = vclz %v1513
    %v1515 = vsub.s32 %v1514, 2
    %vm1516 = vcmp.gt.s32.totalorder 0, %v1515
    %v1517 = vsel %vm1516, 0, %v1515
    %v1518 = vsub.s32 32, %v1517
    %v1519 = vshll.u32 %v1510, %v1517
    %v1520 = vshrl.u32 %v1502, %v1518
    %v1521 = vor.u32 %v1519, %v1520
    %v1522 = vsub.s32 4294967266, %v1517
    %v1523 = vadd.s32 %v1522, 127
    %v1524 = vshll.u32 %v1523, 23
    %v1525 = vor.u32 4788187, %v1524
    %v1526 = vand.u32 2147483647, %v1525
    %v1528 = vcvt.s32.f32 %v1521
    %v1529 = vmul.f32 %v1528, %v1526
    %v1530 = vxor.u32 %v1529, 2147483648
    %v1531 = vsel %vm1410, %v1530, %v1529
    %v1532 = vsub.s32 4, %v1508
    %v1533 = vsel %vm1410, %v1532, %v1508
    %v1534 = vsel %vm1409, %v482, %v1531
    %v1535 = vsel %vm1409, 0, %v1533
    %v1536 = vmul.f32 %v1534, %v1534
    %v1537 = vmul.f32 %v1536, -0.001358992
    %v1538 = vadd.f32 %v1537, 0.041655596
    %v1539 = vmul.f32 %v1536, %v1538
    %v1540 = vadd.f32 %v1539, -0.4999988
    %v1541 = vmul.f32 %v1536, %v1540
    %v1542 = vadd.f32 1.0, %v1541
    %v1543 = vmul.f32 %v1534, %v1534
    %v1544 = vmul.f32 %v1543, -0.00019511016
    %v1545 = vadd.f32 %v1544, 0.008332121
    %v1546 = vmul.f32 %v1543, %v1545
    %v1547 = vadd.f32 %v1546, -0.16666654
    %v1548 = vmul.f32 %v1543, %v1547
    %v1549 = vadd.f32 %v1548, 1.0
    %v1550 = vmul.f32 %v1549, %v1534
    %vm1551 = vweird.f32 %v482
    %v1552 = vand.u32 %v1535, 3
    %vm1553 = vcmp.lt.s32.totalorder %v1552, 2
    %vm1554 = vcmp.eq.s32.totalorder %v1552, 0
    %v1555 = vxor.u32 %v1550, 2147483648
    %v1556 = vsel %vm1554, %v1542, %v1555
    %vm1557 = vcmp.eq.s32.totalorder %v1552, 2
    %v1558 = vxor.u32 %v1542, 2147483648
    %v1559 = vsel %vm1557, %v1558, %v1550
    %v1560 = vsel %vm1553, %v1556, %v1559
    %v1561 = vsel %vm1551, nan, %v1560
    %v1562 = vand.u32 2147483647, %v483
    %vm1563 = vcmp.le.f32.partialorder %v1562, 0.7853982
    %vm1564 = vcmp.lt.s32.totalorder %v483, 0
    %v1565 = vand.u32 %v483, 2139095040
    %v1566 = vshrl.u32 %v1565, 23
    %v1567 = vsub.s32 %v1566, 127
    %v1568 = vand.u32 2147483647, %v483
    %v1569 = vand.u32 %v1568, 8388607
    %v1570 = vor.u32 %v1569, 8388608
    %v1571 = vsub.s32 0, %v1570
    %v1572 = vadd.s32 %v1567, 1
    %vm1573 = vcmp.gt.s32.totalorder %v1572, 0
    %v1574 = vsel %vm1573, %v1572, 0
    %v1575 = vshrl.u32 %v1574, 5
    %v1576 = vand.u32 %v1574, 31
    %v1577 = vsub.s32 32, %v1576
    %v1578 = vshrl.u32 683565275, %v1577
    %v1579 = vshll.u32 683565275, %v1576
    %v1580 = vshrl.u32 2475754826, %v1577
    %v1581 = vor.u32 %v1579, %v1580
    %v1582 = vshll.u32 2475754826, %v1576
    %v1583 = vshrl.u32 2131351028, %v1577
    %v1584 = vor.u32 %v1582, %v1583
    %v1585 = vshll.u32 2131351028, %v1576
    %v1586 = vshrl.u32 2102212464, %v1577
    %v1587 = vor.u32 %v1585, %v1586
    %v1588 = vshll.u32 2102212464, %v1576
    %v1589 = vshrl.u32 920167782, %v1577
    %v1590 = vor.u32 %v1588, %v1589
    %v1591 = vshll.u32 920167782, %v1576
    %v1592 = vshrl.u32 1326507024, %v1577
    %v1593 = vor.u32 %v1591, %v1592
    %vm1594 = vcmp.lt.s32.totalorder %v1575, 1
    %vm1595 = vcmp.lt.s32.totalorder %v1575, 2
    %vm1596 = vcmp.lt.s32.totalorder %v1575, 3
    %vm1597 = vcmp.lt.s32.totalorder %v1575, 4
    %v1598 = vsel %vm1594, %v1578, %v1581
    %v1599 = vsel %vm1597, %v1587, 2102212464
    %v1600 = vsel %vm1596, %v1584, %v1599
    %v1601 = vsel %vm1595, %v1598, %v1600
    %v1602 = vsel %vm1594, %v1581, %v1584
    %v1603 = vsel %vm1597, %v1590, 920167782
    %v1604 = vsel %vm1596, %v1587, %v1603
    %v1605 = vsel %vm1595, %v1602, %v1604
    %v1606 = vsel %vm1594, %v1584, %v1587
    %v1607 = vsel %vm1597, %v1593, 1326507024
    %v1608 = vsel %vm1596, %v1590, %v1607
    %v1609 = vsel %vm1595, %v1606, %v1608
    %v1610 = vshll.u32 %v1570, 8
    %v1611 = vand.u32 %v1610, 65535
    %v1612 = vshrl.u32 %v1610, 16
    %v1613 = vand.u32 %v1609, 65535
    %v1614 = vshrl.u32 %v1609, 16
    %v1615 = vmul.u32 %v1611, %v1613
    %v1616 = vmul.u32 %v1611, %v1614
    %v1617 = vmul.u32 %v1612, %v1613
    %v1618 = vmul.u32 %v1612, %v1614
    %v1619 = vshll.u32 %v1616, 16
    %v1620 = vshrl.u32 %v1616, 16
    %v1621 = vshll.u32 %v1617, 16
    %v1622 = vshrl.u32 %v1617, 16
    %vm1623 = vc.u32 %v1615, %v1619
    %v1624 = vsel %vm1623, 1, 0
    %v1625 = vadd.s32 %v1615, %v1619
    %v1626 = vadd.s32 %v1618, %v1624
    %vm1627 = vc.u32 %v1625, %v1621
    %v1628 = vsel %vm1627, 1, 0
    %v1629 = vadd.s32 %v1625, %v1621
    %v1630 = vadd.s32 %v1626, %v1628
    %v1631 = vadd.s32 %v1630, %v1620
    %v1632 = vadd.s32 %v1631, %v1622
    %v1633 = vand.u32 %v1610, 65535
    %v1634 = vshrl.u32 %v1610, 16
    %v1635 = vand.u32 %v1605, 65535
    %v1636 = vshrl.u32 %v1605, 16
    %v1637 = vmul.u32 %v1633, %v1635
    %v1638 = vmul.u32 %v1633, %v1636
    %v1639 = vmul.u32 %v1634, %v1635
    %v1640 = vmul.u32 %v1634, %v1636
    %v1641 = vshll.u32 %v1638, 16
    %v1642 = vshrl.u32 %v1638, 16
    %v1643 = vshll.u32 %v1639, 16
    %v1644 = vshrl.u32 %v1639, 16
    %vm1645 = vc.u32 %v1637, %v1641
    %v1646 = vsel %vm1645, 1, 0
    %v1647 = vadd.s32 %v1637, %v1641
    %v1648 = vadd.s32 %v1640, %v1646
    %vm1649 = vc.u32 %v1647, %v1643
    %v1650 = vsel %vm1649, 1, 0
    %v1651 = vadd.s32 %v1647, %v1643
    %v1652 = vadd.s32 %v1648, %v1650
    %v1653 = vadd.s32 %v1652, %v1642
    %v1654 = vadd.s32 %v1653, %v1644
    %v1655 = vmul.u32 %v1610, %v1601
    %v1656 = vadd.s32 %v1632, %v1651
    %vm1657 = vc.u32 %v1632, %v1651
    %v1658 = vadd.s32 %v1654, 1
    %v1659 = vsel %vm1657, %v1658, %v1654
    %v1660 = vadd.s32 %v1655, %v1659
    %v1661 = vadd.s32 %v1660, 536870912
    %v1662 = vshrl.u32 %v1661, 30
    %v1663 = vshll.u32 %v1662, 30
    %v1664 = vsub.s32 %v1660, %v1663
    %vm1665 = vcmp.lt.s32.totalorder %v1664, 0
    %v1666 = vsub.s32 0, %v1664
    %v1667 = vsel %vm1665, %v1666, %v1664
    %v1668 = vclz %v1667
    %v1669 = vsub.s32 %v1668, 2
    %vm1670 = vcmp.gt.s32.totalorder 0, %v1669
    %v1671 = vsel %vm1670, 0, %v1669
    %v1672 = vsub.s32 32, %v1671
    %v1673 = vshll.u32 %v1664, %v1671
    %v1674 = vshrl.u32 %v1656, %v1672
    %v1675 = vor.u32 %v1673, %v1674
    %v1676 = vsub.s32 4294967266, %v1671
    %v1677 = vadd.s32 %v1676, 127
    %v1678 = vshll.u32 %v1677, 23
    %v1679 = vor.u32 4788187, %v1678
    %v1680 = vand.u32 2147483647, %v1679
    %v1682 = vcvt.s32.f32 %v1675
    %v1683 = vmul.f32 %v1682, %v1680
    %v1684 = vxor.u32 %v1683, 2147483648
    %v1685 = vsel %vm1564, %v1684, %v1683
    %v1686 = vsub.s32 4, %v1662
    %v1687 = vsel %vm1564, %v1686, %v1662
    %v1688 = vsel %vm1563, %v483, %v1685
    %v1689 = vsel %vm1563, 0, %v1687
    %v1690 = vmul.f32 %v1688, %v1688
    %v1691 = vmul.f32 %v1690, -0.001358992
    %v1692 = vadd.f32 %v1691, 0.041655596
    %v1693 = vmul.f32 %v1690, %v1692
    %v1694 = vadd.f32 %v1693, -0.4999988
    %v1695 = vmul.f32 %v1690, %v1694
    %v1696 = vadd.f32 1.0, %v1695
    %v1697 = vmul.f32 %v1688, %v1688
    %v1698 = vmul.f32 %v1697, -0.00019511016
    %v1699 = vadd.f32 %v1698, 0.008332121
    %v1700 = vmul.f32 %v1697, %v1699
    %v1701 = vadd.f32 %v1700, -0.16666654
    %v1702 = vmul.f32 %v1697, %v1701
    %v1703 = vadd.f32 %v1702, 1.0
    %v1704 = vmul.f32 %v1703, %v1688
    %vm1705 = vweird.f32 %v483
    %v1706 = vand.u32 %v1689, 3
    %vm1707 = vcmp.lt.s32.totalorder %v1706, 2
    %vm1708 = vcmp.eq.s32.totalorder %v1706, 0
    %v1709 = vxor.u32 %v1704, 2147483648
    %v1710 = vsel %vm1708, %v1696, %v1709
    %vm1711 = vcmp.eq.s32.totalorder %v1706, 2
    %v1712 = vxor.u32 %v1696, 2147483648
    %v1713 = vsel %vm1711, %v1712, %v1704
    %v1714 = vsel %vm1707, %v1710, %v1713
    %v1715 = vsel %vm1705, nan, %v1714
    %v1716 = vmul.f32 %v468, %v637
    %v1717 = vmul.f32 %v469, %v791
    %v1718 = vmul.f32 %v470, %v945
    %v1719 = vmul.f32 %v471, %v1099
    %v1720 = vmul.f32 %v472, %v1253
    %v1721 = vmul.f32 %v473, %v1407
    %v1722 = vmul.f32 %v474, %v1561
    %v1723 = vmul.f32 %v475, %v1715
    %v1724 = vand.u32 2147483647, %v476
    %vm1725 = vcmp.le.f32.partialorder %v1724, 0.7853982
    %vm1726 = vcmp.lt.s32.totalorder %v476, 0
    %v1727 = vand.u32 %v476, 2139095040
    %v1728 = vshrl.u32 %v1727, 23
    %v1729 = vsub.s32 %v1728, 127
    %v1730 = vand.u32 2147483647, %v476
    %v1731 = vand.u32 %v1730, 8388607
    %v1732 = vor.u32 %v1731, 8388608
    %v1733 = vsub.s32 0, %v1732
    %v1734 = vadd.s32 %v1729, 1
    %vm1735 = vcmp.gt.s32.totalorder %v1734, 0
    %v1736 = vsel %vm1735, %v1734, 0
    %v1737 = vshrl.u32 %v1736, 5
    %v1738 = vand.u32 %v1736, 31
    %v1739 = vsub.s32 32, %v1738
    %v1740 = vshrl.u32 683565275, %v1739
    %v1741 = vshll.u32 683565275, %v1738
    %v1742 = vshrl.u32 2475754826, %v1739
    %v1743 = vor.u32 %v1741, %v1742
    %v1744 = vshll.u32 2475754826, %v1738
    %v1745 = vshrl.u32 2131351028, %v1739
    %v1746 = vor.u32 %v1744, %v1745
    %v1747 = vshll.u32 2131351028, %v1738
    %v1748 = vshrl.u32 2102212464, %v1739
    %v1749 = vor.u32 %v1747, %v1748
    %v1750 = vshll.u32 2102212464, %v1738
    %v1751 = vshrl.u32 920167782, %v1739
    %v1752 = vor.u32 %v1750, %v1751
    %v1753 = vshll.u32 920167782, %v1738
    %v1754 = vshrl.u32 1326507024, %v1739
    %v1755 = vor.u32 %v1753, %v1754
    %vm1756 = vcmp.lt.s32.totalorder %v1737, 1
    %vm1757 = vcmp.lt.s32.totalorder %v1737, 2
    %vm1758 = vcmp.lt.s32.totalorder %v1737, 3
    %vm1759 = vcmp.lt.s32.totalorder %v1737, 4
    %v1760 = vsel %vm1756, %v1740, %v1743
    %v1761 = vsel %vm1759, %v1749, 2102212464
    %v1762 = vsel %vm1758, %v1746, %v1761
    %v1763 = vsel %vm1757, %v1760, %v1762
    %v1764 = vsel %vm1756, %v1743, %v1746
    %v1765 = vsel %vm1759, %v1752, 920167782
    %v1766 = vsel %vm1758, %v1749, %v1765
    %v1767 = vsel %vm1757, %v1764, %v1766
    %v1768 = vsel %vm1756, %v1746, %v1749
    %v1769 = vsel %vm1759, %v1755, 1326507024
    %v1770 = vsel %vm1758, %v1752, %v1769
    %v1771 = vsel %vm1757, %v1768, %v1770
    %v1772 = vshll.u32 %v1732, 8
    %v1773 = vand.u32 %v1772, 65535
    %v1774 = vshrl.u32 %v1772, 16
    %v1775 = vand.u32 %v1771, 65535
    %v1776 = vshrl.u32 %v1771, 16
    %v1777 = vmul.u32 %v1773, %v1775
    %v1778 = vmul.u32 %v1773, %v1776
    %v1779 = vmul.u32 %v1774, %v1775
    %v1780 = vmul.u32 %v1774, %v1776
    %v1781 = vshll.u32 %v1778, 16
    %v1782 = vshrl.u32 %v1778, 16
    %v1783 = vshll.u32 %v1779, 16
    %v1784 = vshrl.u32 %v1779, 16
    %vm1785 = vc.u32 %v1777, %v1781
    %v1786 = vsel %vm1785, 1, 0
    %v1787 = vadd.s32 %v1777, %v1781
    %v1788 = vadd.s32 %v1780, %v1786
    %vm1789 = vc.u32 %v1787, %v1783
    %v1790 = vsel %vm1789, 1, 0
    %v1791 = vadd.s32 %v1787, %v1783
    %v1792 = vadd.s32 %v1788, %v1790
    %v1793 = vadd.s32 %v1792, %v1782
    %v1794 = vadd.s32 %v1793, %v1784
    %v1795 = vand.u32 %v1772, 65535
    %v1796 = vshrl.u32 %v1772, 16
    %v1797 = vand.u32 %v1767, 65535
    %v1798 = vshrl.u32 %v1767, 16
    %v1799 = vmul.u32 %v1795, %v1797
    %v1800 = vmul.u32 %v1795, %v1798
    %v1801 = vmul.u32 %v1796, %v1797
    %v1802 = vmul.u32 %v1796, %v1798
    %v1803 = vshll.u32 %v1800, 16
    %v1804 = vshrl.u32 %v1800, 16
    %v1805 = vshll.u32 %v1801, 16
    %v1806 = vshrl.u32 %v1801, 16
    %vm1807 = vc.u32 %v1799, %v1803
    %v1808 = vsel %vm1807, 1, 0
    %v1809 = vadd.s32 %v1799, %v1803
    %v1810 = vadd.s32 %v1802, %v1808
    %vm1811 = vc.u32 %v1809, %v1805
    %v1812 = vsel %vm1811, 1, 0
    %v1813 = vadd.s32 %v1809, %v1805
    %v1814 = vadd.s32 %v1810, %v1812
    %v1815 = vadd.s32 %v1814, %v1804
    %v1816 = vadd.s32 %v1815, %v1806
    %v1817 = vmul.u32 %v1772, %v1763
    %v1818 = vadd.s32 %v1794, %v1813
    %vm1819 = vc.u32 %v1794, %v1813
    %v1820 = vadd.s32 %v1816, 1
    %v1821 = vsel %vm1819, %v1820, %v1816
    %v1822 = vadd.s32 %v1817, %v1821
    %v1823 = vadd.s32 %v1822, 536870912
    %v1824 = vshrl.u32 %v1823, 30
    %v1825 = vshll.u32 %v1824, 30
    %v1826 = vsub.s32 %v1822, %v1825
    %vm1827 = vcmp.lt.s32.totalorder %v1826, 0
    %v1828 = vsub.s32 0, %v1826
    %v1829 = vsel %vm1827, %v1828, %v1826
    %v1830 = vclz %v1829
    %v1831 = vsub.s32 %v1830, 2
    %vm1832 = vcmp.gt.s32.totalorder 0, %v1831
    %v1833 = vsel %vm1832, 0, %v1831
    %v1834 = vsub.s32 32, %v1833
    %v1835 = vshll.u32 %v1826, %v1833
    %v1836 = vshrl.u32 %v1818, %v1834
    %v1837 = vor.u32 %v1835, %v1836
    %v1838 = vsub.s32 4294967266, %v1833
    %v1839 = vadd.s32 %v1838, 127
    %v1840 = vshll.u32 %v1839, 23
    %v1841 = vor.u32 4788187, %v1840
    %v1842 = vand.u32 2147483647, %v1841
    %v1844 = vcvt.s32.f32 %v1837
    %v1845 = vmul.f32 %v1844, %v1842
    %v1846 = vxor.u32 %v1845, 2147483648
    %v1847 = vsel %vm1726, %v1846, %v1845
    %v1848 = vsub.s32 4, %v1824
    %v1849 = vsel %vm1726, %v1848, %v1824
    %v1850 = vsel %vm1725, %v476, %v1847
    %v1851 = vsel %vm1725, 0, %v1849
    %v1852 = vmul.f32 %v1850, %v1850
    %v1853 = vmul.f32 %v1852, -0.001358992
    %v1854 = vadd.f32 %v1853, 0.041655596
    %v1855 = vmul.f32 %v1852, %v1854
    %v1856 = vadd.f32 %v1855, -0.4999988
    %v1857 = vmul.f32 %v1852, %v1856
    %v1858 = vadd.f32 1.0, %v1857
    %v1859 = vmul.f32 %v1850, %v1850
    %v1860 = vmul.f32 %v1859, -0.00019511016
    %v1861 = vadd.f32 %v1860, 0.008332121
    %v1862 = vmul.f32 %v1859, %v1861
    %v1863 = vadd.f32 %v1862, -0.16666654
    %v1864 = vmul.f32 %v1859, %v1863
    %v1865 = vadd.f32 %v1864, 1.0
    %v1866 = vmul.f32 %v1865, %v1850
    %vm1867 = vweird.f32 %v476
    %v1868 = vadd.s32 %v1851, 3
    %v1869 = vand.u32 %v1868, 3
    %vm1870 = vcmp.lt.s32.totalorder %v1869, 2
    %vm1871 = vcmp.eq.s32.totalorder %v1869, 0
    %v1872 = vxor.u32 %v1866, 2147483648
    %v1873 = vsel %vm1871, %v1858, %v1872
    %vm1874 = vcmp.eq.s32.totalorder %v1869, 2
    %v1875 = vxor.u32 %v1858, 2147483648
    %v1876 = vsel %vm1874, %v1875, %v1866
    %v1877 = vsel %vm1870, %v1873, %v1876
    %v1878 = vsel %vm1867, nan, %v1877
    %v1879 = vand.u32 2147483647, %v477
    %vm1880 = vcmp.le.f32.partialorder %v1879, 0.7853982
    %vm1881 = vcmp.lt.s32.totalorder %v477, 0
    %v1882 = vand.u32 %v477, 2139095040
    %v1883 = vshrl.u32 %v1882, 23
    %v1884 = vsub.s32 %v1883, 127
    %v1885 = vand.u32 2147483647, %v477
    %v1886 = vand.u32 %v1885, 8388607
    %v1887 = vor.u32 %v1886, 8388608
    %v1888 = vsub.s32 0, %v1887
    %v1889 = vadd.s32 %v1884, 1
    %vm1890 = vcmp.gt.s32.totalorder %v1889, 0
    %v1891 = vsel %vm1890, %v1889, 0
    %v1892 = vshrl.u32 %v1891, 5
    %v1893 = vand.u32 %v1891, 31
    %v1894 = vsub.s32 32, %v1893
    %v1895 = vshrl.u32 683565275, %v1894
    %v1896 = vshll.u32 683565275, %v1893
    %v1897 = vshrl.u32 2475754826, %v1894
    %v1898 = vor.u32 %v1896, %v1897
    %v1899 = vshll.u32 2475754826, %v1893
    %v1900 = vshrl.u32 2131351028, %v1894
    %v1901 = vor.u32 %v1899, %v1900
    %v1902 = vshll.u32 2131351028, %v1893
    %v1903 = vshrl.u32 2102212464, %v1894
    %v1904 = vor.u32 %v1902, %v1903
    %v1905 = vshll.u32 2102212464, %v1893
    %v1906 = vshrl.u32 920167782, %v1894
    %v1907 = vor.u32 %v1905, %v1906
    %v1908 = vshll.u32 920167782, %v1893
    %v1909 = vshrl.u32 1326507024, %v1894
    %v1910 = vor.u32 %v1908, %v1909
    %vm1911 = vcmp.lt.s32.totalorder %v1892, 1
    %vm1912 = vcmp.lt.s32.totalorder %v1892, 2
    %vm1913 = vcmp.lt.s32.totalorder %v1892, 3
    %vm1914 = vcmp.lt.s32.totalorder %v1892, 4
    %v1915 = vsel %vm1911, %v1895, %v1898
    %v1916 = vsel %vm1914, %v1904, 2102212464
    %v1917 = vsel %vm1913, %v1901, %v1916
    %v1918 = vsel %vm1912, %v1915, %v1917
    %v1919 = vsel %vm1911, %v1898, %v1901
    %v1920 = vsel %vm1914, %v1907, 920167782
    %v1921 = vsel %vm1913, %v1904, %v1920
    %v1922 = vsel %vm1912, %v1919, %v1921
    %v1923 = vsel %vm1911, %v1901, %v1904
    %v1924 = vsel %vm1914, %v1910, 1326507024
    %v1925 = vsel %vm1913, %v1907, %v1924
    %v1926 = vsel %vm1912, %v1923, %v1925
    %v1927 = vshll.u32 %v1887, 8
    %v1928 = vand.u32 %v1927, 65535
    %v1929 = vshrl.u32 %v1927, 16
    %v1930 = vand.u32 %v1926, 65535
    %v1931 = vshrl.u32 %v1926, 16
    %v1932 = vmul.u32 %v1928, %v1930
    %v1933 = vmul.u32 %v1928, %v1931
    %v1934 = vmul.u32 %v1929, %v1930
    %v1935 = vmul.u32 %v1929, %v1931
    %v1936 = vshll.u32 %v1933, 16
    %v1937 = vshrl.u32 %v1933, 16
    %v1938 = vshll.u32 %v1934, 16
    %v1939 = vshrl.u32 %v1934, 16
    %vm1940 = vc.u32 %v1932, %v1936
    %v1941 = vsel %vm1940, 1, 0
    %v1942 = vadd.s32 %v1932, %v1936
    %v1943 = vadd.s32 %v1935, %v1941
    %vm1944 = vc.u32 %v1942, %v1938
    %v1945 = vsel %vm1944, 1, 0
    %v1946 = vadd.s32 %v1942, %v1938
    %v1947 = vadd.s32 %v1943, %v1945
    %v1948 = vadd.s32 %v1947, %v1937
    %v1949 = vadd.s32 %v1948, %v1939
    %v1950 = vand.u32 %v1927, 65535
    %v1951 = vshrl.u32 %v1927, 16
    %v1952 = vand.u32 %v1922, 65535
    %v1953 = vshrl.u32 %v1922, 16
    %v1954 = vmul.u32 %v1950, %v1952
    %v1955 = vmul.u32 %v1950, %v1953
    %v1956 = vmul.u32 %v1951, %v1952
    %v1957 = vmul.u32 %v1951, %v1953
    %v1958 = vshll.u32 %v1955, 16
    %v1959 = vshrl.u32 %v1955, 16
    %v1960 = vshll.u32 %v1956, 16
    %v1961 = vshrl.u32 %v1956, 16
    %vm1962 = vc.u32 %v1954, %v1958
    %v1963 = vsel %vm1962, 1, 0
    %v1964 = vadd.s32 %v1954, %v1958
    %v1965 = vadd.s32 %v1957, %v1963
    %vm1966 = vc.u32 %v1964, %v1960
    %v1967 = vsel %vm1966, 1, 0
    %v1968 = vadd.s32 %v1964, %v1960
    %v1969 = vadd.s32 %v1965, %v1967
    %v1970 = vadd.s32 %v1969, %v1959
    %v1971 = vadd.s32 %v1970, %v1961
    %v1972 = vmul.u32 %v1927, %v1918
    %v1973 = vadd.s32 %v1949, %v1968
    %vm1974 = vc.u32 %v1949, %v1968
    %v1975 = vadd.s32 %v1971, 1
    %v1976 = vsel %vm1974, %v1975, %v1971
    %v1977 = vadd.s32 %v1972, %v1976
    %v1978 = vadd.s32 %v1977, 536870912
    %v1979 = vshrl.u32 %v1978, 30
    %v1980 = vshll.u32 %v1979, 30
    %v1981 = vsub.s32 %v1977, %v1980
    %vm1982 = vcmp.lt.s32.totalorder %v1981, 0
    %v1983 = vsub.s32 0, %v1981
    %v1984 = vsel %vm1982, %v1983, %v1981
    %v1985 = vclz %v1984
    %v1986 = vsub.s32 %v1985, 2
    %vm1987 = vcmp.gt.s32.totalorder 0, %v1986
    %v1988 = vsel %vm1987, 0, %v1986
    %v1989 = vsub.s32 32, %v1988
    %v1990 = vshll.u32 %v1981, %v1988
    %v1991 = vshrl.u32 %v1973, %v1989
    %v1992 = vor.u32 %v1990, %v1991
    %v1993 = vsub.s32 4294967266, %v1988
    %v1994 = vadd.s32 %v1993, 127
    %v1995 = vshll.u32 %v1994, 23
    %v1996 = vor.u32 4788187, %v1995
    %v1997 = vand.u32 2147483647, %v1996
    %v1999 = vcvt.s32.f32 %v1992
    %v2000 = vmul.f32 %v1999, %v1997
    %v2001 = vxor.u32 %v2000, 2147483648
    %v2002 = vsel %vm1881, %v2001, %v2000
    %v2003 = vsub.s32 4, %v1979
    %v2004 = vsel %vm1881, %v2003, %v1979
    %v2005 = vsel %vm1880, %v477, %v2002
    %v2006 = vsel %vm1880, 0, %v2004
    %v2007 = vmul.f32 %v2005, %v2005
    %v2008 = vmul.f32 %v2007, -0.001358992
    %v2009 = vadd.f32 %v2008, 0.041655596
    %v2010 = vmul.f32 %v2007, %v2009
    %v2011 = vadd.f32 %v2010, -0.4999988
    %v2012 = vmul.f32 %v2007, %v2011
    %v2013 = vadd.f32 1.0, %v2012
    %v2014 = vmul.f32 %v2005, %v2005
    %v2015 = vmul.f32 %v2014, -0.00019511016
    %v2016 = vadd.f32 %v2015, 0.008332121
    %v2017 = vmul.f32 %v2014, %v2016
    %v2018 = vadd.f32 %v2017, -0.16666654
    %v2019 = vmul.f32 %v2014, %v2018
    %v2020 = vadd.f32 %v2019, 1.0
    %v2021 = vmul.f32 %v2020, %v2005
    %vm2022 = vweird.f32 %v477
    %v2023 = vadd.s32 %v2006, 3
    %v2024 = vand.u32 %v2023, 3
    %vm2025 = vcmp.lt.s32.totalorder %v2024, 2
    %vm2026 = vcmp.eq.s32.totalorder %v2024, 0
    %v2027 = vxor.u32 %v2021, 2147483648
    %v2028 = vsel %vm2026, %v2013, %v2027
    %vm2029 = vcmp.eq.s32.totalorder %v2024, 2
    %v2030 = vxor.u32 %v2013, 2147483648
    %v2031 = vsel %vm2029, %v2030, %v2021
    %v2032 = vsel %vm2025, %v2028, %v2031
    %v2033 = vsel %vm2022, nan, %v2032
    %v2034 = vand.u32 2147483647, %v478
    %vm2035 = vcmp.le.f32.partialorder %v2034, 0.7853982
    %vm2036 = vcmp.lt.s32.totalorder %v478, 0
    %v2037 = vand.u32 %v478, 2139095040
    %v2038 = vshrl.u32 %v2037, 23
    %v2039 = vsub.s32 %v2038, 127
    %v2040 = vand.u32 2147483647, %v478
    %v2041 = vand.u32 %v2040, 8388607
    %v2042 = vor.u32 %v2041, 8388608
    %v2043 = vsub.s32 0, %v2042
    %v2044 = vadd.s32 %v2039, 1
    %vm2045 = vcmp.gt.s32.totalorder %v2044, 0
    %v2046 = vsel %vm2045, %v2044, 0
    %v2047 = vshrl.u32 %v2046, 5
    %v2048 = vand.u32 %v2046, 31
    %v2049 = vsub.s32 32, %v2048
    %v2050 = vshrl.u32 683565275, %v2049
    %v2051 = vshll.u32 683565275, %v2048
    %v2052 = vshrl.u32 2475754826, %v2049
    %v2053 = vor.u32 %v2051, %v2052
    %v2054 = vshll.u32 2475754826, %v2048
    %v2055 = vshrl.u32 2131351028, %v2049
    %v2056 = vor.u32 %v2054, %v2055
    %v2057 = vshll.u32 2131351028, %v2048
    %v2058 = vshrl.u32 2102212464, %v2049
    %v2059 = vor.u32 %v2057, %v2058
    %v2060 = vshll.u32 2102212464, %v2048
    %v2061 = vshrl.u32 920167782, %v2049
    %v2062 = vor.u32 %v2060, %v2061
    %v2063 = vshll.u32 920167782, %v2048
    %v2064 = vshrl.u32 1326507024, %v2049
    %v2065 = vor.u32 %v2063, %v2064
    %vm2066 = vcmp.lt.s32.totalorder %v2047, 1
    %vm2067 = vcmp.lt.s32.totalorder %v2047, 2
    %vm2068 = vcmp.lt.s32.totalorder %v2047, 3
    %vm2069 = vcmp.lt.s32.totalorder %v2047, 4
    %v2070 = vsel %vm2066, %v2050, %v2053
    %v2071 = vsel %vm2069, %v2059, 2102212464
    %v2072 = vsel %vm2068, %v2056, %v2071
    %v2073 = vsel %vm2067, %v2070, %v2072
    %v2074 = vsel %vm2066, %v2053, %v2056
    %v2075 = vsel %vm2069, %v2062, 920167782
    %v2076 = vsel %vm2068, %v2059, %v2075
    %v2077 = vsel %vm2067, %v2074, %v2076
    %v2078 = vsel %vm2066, %v2056, %v2059
    %v2079 = vsel %vm2069, %v2065, 1326507024
    %v2080 = vsel %vm2068, %v2062, %v2079
    %v2081 = vsel %vm2067, %v2078, %v2080
    %v2082 = vshll.u32 %v2042, 8
    %v2083 = vand.u32 %v2082, 65535
    %v2084 = vshrl.u32 %v2082, 16
    %v2085 = vand.u32 %v2081, 65535
    %v2086 = vshrl.u32 %v2081, 16
    %v2087 = vmul.u32 %v2083, %v2085
    %v2088 = vmul.u32 %v2083, %v2086
    %v2089 = vmul.u32 %v2084, %v2085
    %v2090 = vmul.u32 %v2084, %v2086
    %v2091 = vshll.u32 %v2088, 16
    %v2092 = vshrl.u32 %v2088, 16
    %v2093 = vshll.u32 %v2089, 16
    %v2094 = vshrl.u32 %v2089, 16
    %vm2095 = vc.u32 %v2087, %v2091
    %v2096 = vsel %vm2095, 1, 0
    %v2097 = vadd.s32 %v2087, %v2091
    %v2098 = vadd.s32 %v2090, %v2096
    %vm2099 = vc.u32 %v2097, %v2093
    %v2100 = vsel %vm2099, 1, 0
    %v2101 = vadd.s32 %v2097, %v2093
    %v2102 = vadd.s32 %v2098, %v2100
    %v2103 = vadd.s32 %v2102, %v2092
    %v2104 = vadd.s32 %v2103, %v2094
    %v2105 = vand.u32 %v2082, 65535
    %v2106 = vshrl.u32 %v2082, 16
    %v2107 = vand.u32 %v2077, 65535
    %v2108 = vshrl.u32 %v2077, 16
    %v2109 = vmul.u32 %v2105, %v2107
    %v2110 = vmul.u32 %v2105, %v2108
    %v2111 = vmul.u32 %v2106, %v2107
    %v2112 = vmul.u32 %v2106, %v2108
    %v2113 = vshll.u32 %v2110, 16
    %v2114 = vshrl.u32 %v2110, 16
    %v2115 = vshll.u32 %v2111, 16
    %v2116 = vshrl.u32 %v2111, 16
    %vm2117 = vc.u32 %v2109, %v2113
    %v2118 = vsel %vm2117, 1, 0
    %v2119 = vadd.s32 %v2109, %v2113
    %v2120 = vadd.s32 %v2112, %v2118
    %vm2121 = vc.u32 %v2119, %v2115
    %v2122 = vsel %vm2121, 1, 0
    %v2123 = vadd.s32 %v2119, %v2115
    %v2124 = vadd.s32 %v2120, %v2122
    %v2125 = vadd.s32 %v2124, %v2114
    %v2126 = vadd.s32 %v2125, %v2116
    %v2127 = vmul.u32 %v2082, %v2073
    %v2128 = vadd.s32 %v2104, %v2123
    %vm2129 = vc.u32 %v2104, %v2123
    %v2130 = vadd.s32 %v2126, 1
    %v2131 = vsel %vm2129, %v2130, %v2126
    %v2132 = vadd.s32 %v2127, %v2131
    %v2133 = vadd.s32 %v2132, 536870912
    %v2134 = vshrl.u32 %v2133, 30
    %v2135 = vshll.u32 %v2134, 30
    %v2136 = vsub.s32 %v2132, %v2135
    %vm2137 = vcmp.lt.s32.totalorder %v2136, 0
    %v2138 = vsub.s32 0, %v2136
    %v2139 = vsel %vm2137, %v2138, %v2136
    %v2140 = vclz %v2139
    %v2141 = vsub.s32 %v2140, 2
    %vm2142 = vcmp.gt.s32.totalorder 0, %v2141
    %v2143 = vsel %vm2142, 0, %v2141
    %v2144 = vsub.s32 32, %v2143
    %v2145 = vshll.u32 %v2136, %v2143
    %v2146 = vshrl.u32 %v2128, %v2144
    %v2147 = vor.u32 %v2145, %v2146
    %v2148 = vsub.s32 4294967266, %v2143
    %v2149 = vadd.s32 %v2148, 127
    %v2150 = vshll.u32 %v2149, 23
    %v2151 = vor.u32 4788187, %v2150
    %v2152 = vand.u32 2147483647, %v2151
    %v2154 = vcvt.s32.f32 %v2147
    %v2155 = vmul.f32 %v2154, %v2152
    %v2156 = vxor.u32 %v2155, 2147483648
    %v2157 = vsel %vm2036, %v2156, %v2155
    %v2158 = vsub.s32 4, %v2134
    %v2159 = vsel %vm2036, %v2158, %v2134
    %v2160 = vsel %vm2035, %v478, %v2157
    %v2161 = vsel %vm2035, 0, %v2159
    %v2162 = vmul.f32 %v2160, %v2160
    %v2163 = vmul.f32 %v2162, -0.001358992
    %v2164 = vadd.f32 %v2163, 0.041655596
    %v2165 = vmul.f32 %v2162, %v2164
    %v2166 = vadd.f32 %v2165, -0.4999988
    %v2167 = vmul.f32 %v2162, %v2166
    %v2168 = vadd.f32 1.0, %v2167
    %v2169 = vmul.f32 %v2160, %v2160
    %v2170 = vmul.f32 %v2169, -0.00019511016
    %v2171 = vadd.f32 %v2170, 0.008332121
    %v2172 = vmul.f32 %v2169, %v2171
    %v2173 = vadd.f32 %v2172, -0.16666654
    %v2174 = vmul.f32 %v2169, %v2173
    %v2175 = vadd.f32 %v2174, 1.0
    %v2176 = vmul.f32 %v2175, %v2160
    %vm2177 = vweird.f32 %v478
    %v2178 = vadd.s32 %v2161, 3
    %v2179 = vand.u32 %v2178, 3
    %vm2180 = vcmp.lt.s32.totalorder %v2179, 2
    %vm2181 = vcmp.eq.s32.totalorder %v2179, 0
    %v2182 = vxor.u32 %v2176, 2147483648
    %v2183 = vsel %vm2181, %v2168, %v2182
    %vm2184 = vcmp.eq.s32.totalorder %v2179, 2
    %v2185 = vxor.u32 %v2168, 2147483648
    %v2186 = vsel %vm2184, %v2185, %v2176
    %v2187 = vsel %vm2180, %v2183, %v2186
    %v2188 = vsel %vm2177, nan, %v2187
    %v2189 = vand.u32 2147483647, %v479
    %vm2190 = vcmp.le.f32.partialorder %v2189, 0.7853982
    %vm2191 = vcmp.lt.s32.totalorder %v479, 0
    %v2192 = vand.u32 %v479, 2139095040
    %v2193 = vshrl.u32 %v2192, 23
    %v2194 = vsub.s32 %v2193, 127
    %v2195 = vand.u32 2147483647, %v479
    %v2196 = vand.u32 %v2195, 8388607
    %v2197 = vor.u32 %v2196, 8388608
    %v2198 = vsub.s32 0, %v2197
    %v2199 = vadd.s32 %v2194, 1
    %vm2200 = vcmp.gt.s32.totalorder %v2199, 0
    %v2201 = vsel %vm2200, %v2199, 0
    %v2202 = vshrl.u32 %v2201, 5
    %v2203 = vand.u32 %v2201, 31
    %v2204 = vsub.s32 32, %v2203
    %v2205 = vshrl.u32 683565275, %v2204
    %v2206 = vshll.u32 683565275, %v2203
    %v2207 = vshrl.u32 2475754826, %v2204
    %v2208 = vor.u32 %v2206, %v2207
    %v2209 = vshll.u32 2475754826, %v2203
    %v2210 = vshrl.u32 2131351028, %v2204
    %v2211 = vor.u32 %v2209, %v2210
    %v2212 = vshll.u32 2131351028, %v2203
    %v2213 = vshrl.u32 2102212464, %v2204
    %v2214 = vor.u32 %v2212, %v2213
    %v2215 = vshll.u32 2102212464, %v2203
    %v2216 = vshrl.u32 920167782, %v2204
    %v2217 = vor.u32 %v2215, %v2216
    %v2218 = vshll.u32 920167782, %v2203
    %v2219 = vshrl.u32 1326507024, %v2204
    %v2220 = vor.u32 %v2218, %v2219
    %vm2221 = vcmp.lt.s32.totalorder %v2202, 1
    %vm2222 = vcmp.lt.s32.totalorder %v2202, 2
    %vm2223 = vcmp.lt.s32.totalorder %v2202, 3
    %vm2224 = vcmp.lt.s32.totalorder %v2202, 4
    %v2225 = vsel %vm2221, %v2205, %v2208
    %v2226 = vsel %vm2224, %v2214, 2102212464
    %v2227 = vsel %vm2223, %v2211, %v2226
    %v2228 = vsel %vm2222, %v2225, %v2227
    %v2229 = vsel %vm2221, %v2208, %v2211
    %v2230 = vsel %vm2224, %v2217, 920167782
    %v2231 = vsel %vm2223, %v2214, %v2230
    %v2232 = vsel %vm2222, %v2229, %v2231
    %v2233 = vsel %vm2221, %v2211, %v2214
    %v2234 = vsel %vm2224, %v2220, 1326507024
    %v2235 = vsel %vm2223, %v2217, %v2234
    %v2236 = vsel %vm2222, %v2233, %v2235
    %v2237 = vshll.u32 %v2197, 8
    %v2238 = vand.u32 %v2237, 65535
    %v2239 = vshrl.u32 %v2237, 16
    %v2240 = vand.u32 %v2236, 65535
    %v2241 = vshrl.u32 %v2236, 16
    %v2242 = vmul.u32 %v2238, %v2240
    %v2243 = vmul.u32 %v2238, %v2241
    %v2244 = vmul.u32 %v2239, %v2240
    %v2245 = vmul.u32 %v2239, %v2241
    %v2246 = vshll.u32 %v2243, 16
    %v2247 = vshrl.u32 %v2243, 16
    %v2248 = vshll.u32 %v2244, 16
    %v2249 = vshrl.u32 %v2244, 16
    %vm2250 = vc.u32 %v2242, %v2246
    %v2251 = vsel %vm2250, 1, 0
    %v2252 = vadd.s32 %v2242, %v2246
    %v2253 = vadd.s32 %v2245, %v2251
    %vm2254 = vc.u32 %v2252, %v2248
    %v2255 = vsel %vm2254, 1, 0
    %v2256 = vadd.s32 %v2252, %v2248
    %v2257 = vadd.s32 %v2253, %v2255
    %v2258 = vadd.s32 %v2257, %v2247
    %v2259 = vadd.s32 %v2258, %v2249
    %v2260 = vand.u32 %v2237, 65535
    %v2261 = vshrl.u32 %v2237, 16
    %v2262 = vand.u32 %v2232, 65535
    %v2263 = vshrl.u32 %v2232, 16
    %v2264 = vmul.u32 %v2260, %v2262
    %v2265 = vmul.u32 %v2260, %v2263
    %v2266 = vmul.u32 %v2261, %v2262
    %v2267 = vmul.u32 %v2261, %v2263
    %v2268 = vshll.u32 %v2265, 16
    %v2269 = vshrl.u32 %v2265, 16
    %v2270 = vshll.u32 %v2266, 16
    %v2271 = vshrl.u32 %v2266, 16
    %vm2272 = vc.u32 %v2264, %v2268
    %v2273 = vsel %vm2272, 1, 0
    %v2274 = vadd.s32 %v2264, %v2268
    %v2275 = vadd.s32 %v2267, %v2273
    %vm2276 = vc.u32 %v2274, %v2270
    %v2277 = vsel %vm2276, 1, 0
    %v2278 = vadd.s32 %v2274, %v2270
    %v2279 = vadd.s32 %v2275, %v2277
    %v2280 = vadd.s32 %v2279, %v2269
    %v2281 = vadd.s32 %v2280, %v2271
    %v2282 = vmul.u32 %v2237, %v2228
    %v2283 = vadd.s32 %v2259, %v2278
    %vm2284 = vc.u32 %v2259, %v2278
    %v2285 = vadd.s32 %v2281, 1
    %v2286 = vsel %vm2284, %v2285, %v2281
    %v2287 = vadd.s32 %v2282, %v2286
    %v2288 = vadd.s32 %v2287, 536870912
    %v2289 = vshrl.u32 %v2288, 30
    %v2290 = vshll.u32 %v2289, 30
    %v2291 = vsub.s32 %v2287, %v2290
    %vm2292 = vcmp.lt.s32.totalorder %v2291, 0
    %v2293 = vsub.s32 0, %v2291
    %v2294 = vsel %vm2292, %v2293, %v2291
    %v2295 = vclz %v2294
    %v2296 = vsub.s32 %v2295, 2
    %vm2297 = vcmp.gt.s32.totalorder 0, %v2296
    %v2298 = vsel %vm2297, 0, %v2296
    %v2299 = vsub.s32 32, %v2298
    %v2300 = vshll.u32 %v2291, %v2298
    %v2301 = vshrl.u32 %v2283, %v2299
    %v2302 = vor.u32 %v2300, %v2301
    %v2303 = vsub.s32 4294967266, %v2298
    %v2304 = vadd.s32 %v2303, 127
    %v2305 = vshll.u32 %v2304, 23
    %v2306 = vor.u32 4788187, %v2305
    %v2307 = vand.u32 2147483647, %v2306
    %v2309 = vcvt.s32.f32 %v2302
    %v2310 = vmul.f32 %v2309, %v2307
    %v2311 = vxor.u32 %v2310, 2147483648
    %v2312 = vsel %vm2191, %v2311, %v2310
    %v2313 = vsub.s32 4, %v2289
    %v2314 = vsel %vm2191, %v2313, %v2289
    %v2315 = vsel %vm2190, %v479, %v2312
    %v2316 = vsel %vm2190, 0, %v2314
    %v2317 = vmul.f32 %v2315, %v2315
    %v2318 = vmul.f32 %v2317, -0.001358992
    %v2319 = vadd.f32 %v2318, 0.041655596
    %v2320 = vmul.f32 %v2317, %v2319
    %v2321 = vadd.f32 %v2320, -0.4999988
    %v2322 = vmul.f32 %v2317, %v2321
    %v2323 = vadd.f32 1.0, %v2322
    %v2324 = vmul.f32 %v2315, %v2315
    %v2325 = vmul.f32 %v2324, -0.00019511016
    %v2326 = vadd.f32 %v2325, 0.008332121
    %v2327 = vmul.f32 %v2324, %v2326
    %v2328 = vadd.f32 %v2327, -0.16666654
    %v2329 = vmul.f32 %v2324, %v2328
    %v2330 = vadd.f32 %v2329, 1.0
    %v2331 = vmul.f32 %v2330, %v2315
    %vm2332 = vweird.f32 %v479
    %v2333 = vadd.s32 %v2316, 3
    %v2334 = vand.u32 %v2333, 3
    %vm2335 = vcmp.lt.s32.totalorder %v2334, 2
    %vm2336 = vcmp.eq.s32.totalorder %v2334, 0
    %v2337 = vxor.u32 %v2331, 2147483648
    %v2338 = vsel %vm2336, %v2323, %v2337
    %vm2339 = vcmp.eq.s32.totalorder %v2334, 2
    %v2340 = vxor.u32 %v2323, 2147483648
    %v2341 = vsel %vm2339, %v2340, %v2331
    %v2342 = vsel %vm2335, %v2338, %v2341
    %v2343 = vsel %vm2332, nan, %v2342
    %v2344 = vand.u32 2147483647, %v480
    %vm2345 = vcmp.le.f32.partialorder %v2344, 0.7853982
    %vm2346 = vcmp.lt.s32.totalorder %v480, 0
    %v2347 = vand.u32 %v480, 2139095040
    %v2348 = vshrl.u32 %v2347, 23
    %v2349 = vsub.s32 %v2348, 127
    %v2350 = vand.u32 2147483647, %v480
    %v2351 = vand.u32 %v2350, 8388607
    %v2352 = vor.u32 %v2351, 8388608
    %v2353 = vsub.s32 0, %v2352
    %v2354 = vadd.s32 %v2349, 1
    %vm2355 = vcmp.gt.s32.totalorder %v2354, 0
    %v2356 = vsel %vm2355, %v2354, 0
    %v2357 = vshrl.u32 %v2356, 5
    %v2358 = vand.u32 %v2356, 31
    %v2359 = vsub.s32 32, %v2358
    %v2360 = vshrl.u32 683565275, %v2359
    %v2361 = vshll.u32 683565275, %v2358
    %v2362 = vshrl.u32 2475754826, %v2359
    %v2363 = vor.u32 %v2361, %v2362
    %v2364 = vshll.u32 2475754826, %v2358
    %v2365 = vshrl.u32 2131351028, %v2359
    %v2366 = vor.u32 %v2364, %v2365
    %v2367 = vshll.u32 2131351028, %v2358
    %v2368 = vshrl.u32 2102212464, %v2359
    %v2369 = vor.u32 %v2367, %v2368
    %v2370 = vshll.u32 2102212464, %v2358
    %v2371 = vshrl.u32 920167782, %v2359
    %v2372 = vor.u32 %v2370, %v2371
    %v2373 = vshll.u32 920167782, %v2358
    %v2374 = vshrl.u32 1326507024, %v2359
    %v2375 = vor.u32 %v2373, %v2374
    %vm2376 = vcmp.lt.s32.totalorder %v2357, 1
    %vm2377 = vcmp.lt.s32.totalorder %v2357, 2
    %vm2378 = vcmp.lt.s32.totalorder %v2357, 3
    %vm2379 = vcmp.lt.s32.totalorder %v2357, 4
    %v2380 = vsel %vm2376, %v2360, %v2363
    %v2381 = vsel %vm2379, %v2369, 2102212464
    %v2382 = vsel %vm2378, %v2366, %v2381
    %v2383 = vsel %vm2377, %v2380, %v2382
    %v2384 = vsel %vm2376, %v2363, %v2366
    %v2385 = vsel %vm2379, %v2372, 920167782
    %v2386 = vsel %vm2378, %v2369, %v2385
    %v2387 = vsel %vm2377, %v2384, %v2386
    %v2388 = vsel %vm2376, %v2366, %v2369
    %v2389 = vsel %vm2379, %v2375, 1326507024
    %v2390 = vsel %vm2378, %v2372, %v2389
    %v2391 = vsel %vm2377, %v2388, %v2390
    %v2392 = vshll.u32 %v2352, 8
    %v2393 = vand.u32 %v2392, 65535
    %v2394 = vshrl.u32 %v2392, 16
    %v2395 = vand.u32 %v2391, 65535
    %v2396 = vshrl.u32 %v2391, 16
    %v2397 = vmul.u32 %v2393, %v2395
    %v2398 = vmul.u32 %v2393, %v2396
    %v2399 = vmul.u32 %v2394, %v2395
    %v2400 = vmul.u32 %v2394, %v2396
    %v2401 = vshll.u32 %v2398, 16
    %v2402 = vshrl.u32 %v2398, 16
    %v2403 = vshll.u32 %v2399, 16
    %v2404 = vshrl.u32 %v2399, 16
    %vm2405 = vc.u32 %v2397, %v2401
    %v2406 = vsel %vm2405, 1, 0
    %v2407 = vadd.s32 %v2397, %v2401
    %v2408 = vadd.s32 %v2400, %v2406
    %vm2409 = vc.u32 %v2407, %v2403
    %v2410 = vsel %vm2409, 1, 0
    %v2411 = vadd.s32 %v2407, %v2403
    %v2412 = vadd.s32 %v2408, %v2410
    %v2413 = vadd.s32 %v2412, %v2402
    %v2414 = vadd.s32 %v2413, %v2404
    %v2415 = vand.u32 %v2392, 65535
    %v2416 = vshrl.u32 %v2392, 16
    %v2417 = vand.u32 %v2387, 65535
    %v2418 = vshrl.u32 %v2387, 16
    %v2419 = vmul.u32 %v2415, %v2417
    %v2420 = vmul.u32 %v2415, %v2418
    %v2421 = vmul.u32 %v2416, %v2417
    %v2422 = vmul.u32 %v2416, %v2418
    %v2423 = vshll.u32 %v2420, 16
    %v2424 = vshrl.u32 %v2420, 16
    %v2425 = vshll.u32 %v2421, 16
    %v2426 = vshrl.u32 %v2421, 16
    %vm2427 = vc.u32 %v2419, %v2423
    %v2428 = vsel %vm2427, 1, 0
    %v2429 = vadd.s32 %v2419, %v2423
    %v2430 = vadd.s32 %v2422, %v2428
    %vm2431 = vc.u32 %v2429, %v2425
    %v2432 = vsel %vm2431, 1, 0
    %v2433 = vadd.s32 %v2429, %v2425
    %v2434 = vadd.s32 %v2430, %v2432
    %v2435 = vadd.s32 %v2434, %v2424
    %v2436 = vadd.s32 %v2435, %v2426
    %v2437 = vmul.u32 %v2392, %v2383
    %v2438 = vadd.s32 %v2414, %v2433
    %vm2439 = vc.u32 %v2414, %v2433
    %v2440 = vadd.s32 %v2436, 1
    %v2441 = vsel %vm2439, %v2440, %v2436
    %v2442 = vadd.s32 %v2437, %v2441
    %v2443 = vadd.s32 %v2442, 536870912
    %v2444 = vshrl.u32 %v2443, 30
    %v2445 = vshll.u32 %v2444, 30
    %v2446 = vsub.s32 %v2442, %v2445
    %vm2447 = vcmp.lt.s32.totalorder %v2446, 0
    %v2448 = vsub.s32 0, %v2446
    %v2449 = vsel %vm2447, %v2448, %v2446
    %v2450 = vclz %v2449
    %v2451 = vsub.s32 %v2450, 2
    %vm2452 = vcmp.gt.s32.totalorder 0, %v2451
    %v2453 = vsel %vm2452, 0, %v2451
    %v2454 = vsub.s32 32, %v2453
    %v2455 = vshll.u32 %v2446, %v2453
    %v2456 = vshrl.u32 %v2438, %v2454
    %v2457 = vor.u32 %v2455, %v2456
    %v2458 = vsub.s32 4294967266, %v2453
    %v2459 = vadd.s32 %v2458, 127
    %v2460 = vshll.u32 %v2459, 23
    %v2461 = vor.u32 4788187, %v2460
    %v2462 = vand.u32 2147483647, %v2461
    %v2464 = vcvt.s32.f32 %v2457
    %v2465 = vmul.f32 %v2464, %v2462
    %v2466 = vxor.u32 %v2465, 2147483648
    %v2467 = vsel %vm2346, %v2466, %v2465
    %v2468 = vsub.s32 4, %v2444
    %v2469 = vsel %vm2346, %v2468, %v2444
    %v2470 = vsel %vm2345, %v480, %v2467
    %v2471 = vsel %vm2345, 0, %v2469
    %v2472 = vmul.f32 %v2470, %v2470
    %v2473 = vmul.f32 %v2472, -0.001358992
    %v2474 = vadd.f32 %v2473, 0.041655596
    %v2475 = vmul.f32 %v2472, %v2474
    %v2476 = vadd.f32 %v2475, -0.4999988
    %v2477 = vmul.f32 %v2472, %v2476
    %v2478 = vadd.f32 1.0, %v2477
    %v2479 = vmul.f32 %v2470, %v2470
    %v2480 = vmul.f32 %v2479, -0.00019511016
    %v2481 = vadd.f32 %v2480, 0.008332121
    %v2482 = vmul.f32 %v2479, %v2481
    %v2483 = vadd.f32 %v2482, -0.16666654
    %v2484 = vmul.f32 %v2479, %v2483
    %v2485 = vadd.f32 %v2484, 1.0
    %v2486 = vmul.f32 %v2485, %v2470
    %vm2487 = vweird.f32 %v480
    %v2488 = vadd.s32 %v2471, 3
    %v2489 = vand.u32 %v2488, 3
    %vm2490 = vcmp.lt.s32.totalorder %v2489, 2
    %vm2491 = vcmp.eq.s32.totalorder %v2489, 0
    %v2492 = vxor.u32 %v2486, 2147483648
    %v2493 = vsel %vm2491, %v2478, %v2492
    %vm2494 = vcmp.eq.s32.totalorder %v2489, 2
    %v2495 = vxor.u32 %v2478, 2147483648
    %v2496 = vsel %vm2494, %v2495, %v2486
    %v2497 = vsel %vm2490, %v2493, %v2496
    %v2498 = vsel %vm2487, nan, %v2497
    %v2499 = vand.u32 2147483647, %v481
    %vm2500 = vcmp.le.f32.partialorder %v2499, 0.7853982
    %vm2501 = vcmp.lt.s32.totalorder %v481, 0
    %v2502 = vand.u32 %v481, 2139095040
    %v2503 = vshrl.u32 %v2502, 23
    %v2504 = vsub.s32 %v2503, 127
    %v2505 = vand.u32 2147483647, %v481
    %v2506 = vand.u32 %v2505, 8388607
    %v2507 = vor.u32 %v2506, 8388608
    %v2508 = vsub.s32 0, %v2507
    %v2509 = vadd.s32 %v2504, 1
    %vm2510 = vcmp.gt.s32.totalorder %v2509, 0
    %v2511 = vsel %vm2510, %v2509, 0
    %v2512 = vshrl.u32 %v2511, 5
    %v2513 = vand.u32 %v2511, 31
    %v2514 = vsub.s32 32, %v2513
    %v2515 = vshrl.u32 683565275, %v2514
    %v2516 = vshll.u32 683565275, %v2513
    %v2517 = vshrl.u32 2475754826, %v2514
    %v2518 = vor.u32 %v2516, %v2517
    %v2519 = vshll.u32 2475754826, %v2513
    %v2520 = vshrl.u32 2131351028, %v2514
    %v2521 = vor.u32 %v2519, %v2520
    %v2522 = vshll.u32 2131351028, %v2513
    %v2523 = vshrl.u32 2102212464, %v2514
    %v2524 = vor.u32 %v2522, %v2523
    %v2525 = vshll.u32 2102212464, %v2513
    %v2526 = vshrl.u32 920167782, %v2514
    %v2527 = vor.u32 %v2525, %v2526
    %v2528 = vshll.u32 920167782, %v2513
    %v2529 = vshrl.u32 1326507024, %v2514
    %v2530 = vor.u32 %v2528, %v2529
    %vm2531 = vcmp.lt.s32.totalorder %v2512, 1
    %vm2532 = vcmp.lt.s32.totalorder %v2512, 2
    %vm2533 = vcmp.lt.s32.totalorder %v2512, 3
    %vm2534 = vcmp.lt.s32.totalorder %v2512, 4
    %v2535 = vsel %vm2531, %v2515, %v2518
    %v2536 = vsel %vm2534, %v2524, 2102212464
    %v2537 = vsel %vm2533, %v2521, %v2536
    %v2538 = vsel %vm2532, %v2535, %v2537
    %v2539 = vsel %vm2531, %v2518, %v2521
    %v2540 = vsel %vm2534, %v2527, 920167782
    %v2541 = vsel %vm2533, %v2524, %v2540
    %v2542 = vsel %vm2532, %v2539, %v2541
    %v2543 = vsel %vm2531, %v2521, %v2524
    %v2544 = vsel %vm2534, %v2530, 1326507024
    %v2545 = vsel %vm2533, %v2527, %v2544
    %v2546 = vsel %vm2532, %v2543, %v2545
    %v2547 = vshll.u32 %v2507, 8
    %v2548 = vand.u32 %v2547, 65535
    %v2549 = vshrl.u32 %v2547, 16
    %v2550 = vand.u32 %v2546, 65535
    %v2551 = vshrl.u32 %v2546, 16
    %v2552 = vmul.u32 %v2548, %v2550
    %v2553 = vmul.u32 %v2548, %v2551
    %v2554 = vmul.u32 %v2549, %v2550
    %v2555 = vmul.u32 %v2549, %v2551
    %v2556 = vshll.u32 %v2553, 16
    %v2557 = vshrl.u32 %v2553, 16
    %v2558 = vshll.u32 %v2554, 16
    %v2559 = vshrl.u32 %v2554, 16
    %vm2560 = vc.u32 %v2552, %v2556
    %v2561 = vsel %vm2560, 1, 0
    %v2562 = vadd.s32 %v2552, %v2556
    %v2563 = vadd.s32 %v2555, %v2561
    %vm2564 = vc.u32 %v2562, %v2558
    %v2565 = vsel %vm2564, 1, 0
    %v2566 = vadd.s32 %v2562, %v2558
    %v2567 = vadd.s32 %v2563, %v2565
    %v2568 = vadd.s32 %v2567, %v2557
    %v2569 = vadd.s32 %v2568, %v2559
    %v2570 = vand.u32 %v2547, 65535
    %v2571 = vshrl.u32 %v2547, 16
    %v2572 = vand.u32 %v2542, 65535
    %v2573 = vshrl.u32 %v2542, 16
    %v2574 = vmul.u32 %v2570, %v2572
    %v2575 = vmul.u32 %v2570, %v2573
    %v2576 = vmul.u32 %v2571, %v2572
    %v2577 = vmul.u32 %v2571, %v2573
    %v2578 = vshll.u32 %v2575, 16
    %v2579 = vshrl.u32 %v2575, 16
    %v2580 = vshll.u32 %v2576, 16
    %v2581 = vshrl.u32 %v2576, 16
    %vm2582 = vc.u32 %v2574, %v2578
    %v2583 = vsel %vm2582, 1, 0
    %v2584 = vadd.s32 %v2574, %v2578
    %v2585 = vadd.s32 %v2577, %v2583
    %vm2586 = vc.u32 %v2584, %v2580
    %v2587 = vsel %vm2586, 1, 0
    %v2588 = vadd.s32 %v2584, %v2580
    %v2589 = vadd.s32 %v2585, %v2587
    %v2590 = vadd.s32 %v2589, %v2579
    %v2591 = vadd.s32 %v2590, %v2581
    %v2592 = vmul.u32 %v2547, %v2538
    %v2593 = vadd.s32 %v2569, %v2588
    %vm2594 = vc.u32 %v2569, %v2588
    %v2595 = vadd.s32 %v2591, 1
    %v2596 = vsel %vm2594, %v2595, %v2591
    %v2597 = vadd.s32 %v2592, %v2596
    %v2598 = vadd.s32 %v2597, 536870912
    %v2599 = vshrl.u32 %v2598, 30
    %v2600 = vshll.u32 %v2599, 30
    %v2601 = vsub.s32 %v2597, %v2600
    %vm2602 = vcmp.lt.s32.totalorder %v2601, 0
    %v2603 = vsub.s32 0, %v2601
    %v2604 = vsel %vm2602, %v2603, %v2601
    %v2605 = vclz %v2604
    %v2606 = vsub.s32 %v2605, 2
    %vm2607 = vcmp.gt.s32.totalorder 0, %v2606
    %v2608 = vsel %vm2607, 0, %v2606
    %v2609 = vsub.s32 32, %v2608
    %v2610 = vshll.u32 %v2601, %v2608
    %v2611 = vshrl.u32 %v2593, %v2609
    %v2612 = vor.u32 %v2610, %v2611
    %v2613 = vsub.s32 4294967266, %v2608
    %v2614 = vadd.s32 %v2613, 127
    %v2615 = vshll.u32 %v2614, 23
    %v2616 = vor.u32 4788187, %v2615
    %v2617 = vand.u32 2147483647, %v2616
    %v2619 = vcvt.s32.f32 %v2612
    %v2620 = vmul.f32 %v2619, %v2617
    %v2621 = vxor.u32 %v2620, 2147483648
    %v2622 = vsel %vm2501, %v2621, %v2620
    %v2623 = vsub.s32 4, %v2599
    %v2624 = vsel %vm2501, %v2623, %v2599
    %v2625 = vsel %vm2500, %v481, %v2622
    %v2626 = vsel %vm2500, 0, %v2624
    %v2627 = vmul.f32 %v2625, %v2625
    %v2628 = vmul.f32 %v2627, -0.001358992
    %v2629 = vadd.f32 %v2628, 0.041655596
    %v2630 = vmul.f32 %v2627, %v2629
    %v2631 = vadd.f32 %v2630, -0.4999988
    %v2632 = vmul.f32 %v2627, %v2631
    %v2633 = vadd.f32 1.0, %v2632
    %v2634 = vmul.f32 %v2625, %v2625
    %v2635 = vmul.f32 %v2634, -0.00019511016
    %v2636 = vadd.f32 %v2635, 0.008332121
    %v2637 = vmul.f32 %v2634, %v2636
    %v2638 = vadd.f32 %v2637, -0.16666654
    %v2639 = vmul.f32 %v2634, %v2638
    %v2640 = vadd.f32 %v2639, 1.0
    %v2641 = vmul.f32 %v2640, %v2625
    %vm2642 = vweird.f32 %v481
    %v2643 = vadd.s32 %v2626, 3
    %v2644 = vand.u32 %v2643, 3
    %vm2645 = vcmp.lt.s32.totalorder %v2644, 2
    %vm2646 = vcmp.eq.s32.totalorder %v2644, 0
    %v2647 = vxor.u32 %v2641, 2147483648
    %v2648 = vsel %vm2646, %v2633, %v2647
    %vm2649 = vcmp.eq.s32.totalorder %v2644, 2
    %v2650 = vxor.u32 %v2633, 2147483648
    %v2651 = vsel %vm2649, %v2650, %v2641
    %v2652 = vsel %vm2645, %v2648, %v2651
    %v2653 = vsel %vm2642, nan, %v2652
    %v2654 = vand.u32 2147483647, %v482
    %vm2655 = vcmp.le.f32.partialorder %v2654, 0.7853982
    %vm2656 = vcmp.lt.s32.totalorder %v482, 0
    %v2657 = vand.u32 %v482, 2139095040
    %v2658 = vshrl.u32 %v2657, 23
    %v2659 = vsub.s32 %v2658, 127
    %v2660 = vand.u32 2147483647, %v482
    %v2661 = vand.u32 %v2660, 8388607
    %v2662 = vor.u32 %v2661, 8388608
    %v2663 = vsub.s32 0, %v2662
    %v2664 = vadd.s32 %v2659, 1
    %vm2665 = vcmp.gt.s32.totalorder %v2664, 0
    %v2666 = vsel %vm2665, %v2664, 0
    %v2667 = vshrl.u32 %v2666, 5
    %v2668 = vand.u32 %v2666, 31
    %v2669 = vsub.s32 32, %v2668
    %v2670 = vshrl.u32 683565275, %v2669
    %v2671 = vshll.u32 683565275, %v2668
    %v2672 = vshrl.u32 2475754826, %v2669
    %v2673 = vor.u32 %v2671, %v2672
    %v2674 = vshll.u32 2475754826, %v2668
    %v2675 = vshrl.u32 2131351028, %v2669
    %v2676 = vor.u32 %v2674, %v2675
    %v2677 = vshll.u32 2131351028, %v2668
    %v2678 = vshrl.u32 2102212464, %v2669
    %v2679 = vor.u32 %v2677, %v2678
    %v2680 = vshll.u32 2102212464, %v2668
    %v2681 = vshrl.u32 920167782, %v2669
    %v2682 = vor.u32 %v2680, %v2681
    %v2683 = vshll.u32 920167782, %v2668
    %v2684 = vshrl.u32 1326507024, %v2669
    %v2685 = vor.u32 %v2683, %v2684
    %vm2686 = vcmp.lt.s32.totalorder %v2667, 1
    %vm2687 = vcmp.lt.s32.totalorder %v2667, 2
    %vm2688 = vcmp.lt.s32.totalorder %v2667, 3
    %vm2689 = vcmp.lt.s32.totalorder %v2667, 4
    %v2690 = vsel %vm2686, %v2670, %v2673
    %v2691 = vsel %vm2689, %v2679, 2102212464
    %v2692 = vsel %vm2688, %v2676, %v2691
    %v2693 = vsel %vm2687, %v2690, %v2692
    %v2694 = vsel %vm2686, %v2673, %v2676
    %v2695 = vsel %vm2689, %v2682, 920167782
    %v2696 = vsel %vm2688, %v2679, %v2695
    %v2697 = vsel %vm2687, %v2694, %v2696
    %v2698 = vsel %vm2686, %v2676, %v2679
    %v2699 = vsel %vm2689, %v2685, 1326507024
    %v2700 = vsel %vm2688, %v2682, %v2699
    %v2701 = vsel %vm2687, %v2698, %v2700
    %v2702 = vshll.u32 %v2662, 8
    %v2703 = vand.u32 %v2702, 65535
    %v2704 = vshrl.u32 %v2702, 16
    %v2705 = vand.u32 %v2701, 65535
    %v2706 = vshrl.u32 %v2701, 16
    %v2707 = vmul.u32 %v2703, %v2705
    %v2708 = vmul.u32 %v2703, %v2706
    %v2709 = vmul.u32 %v2704, %v2705
    %v2710 = vmul.u32 %v2704, %v2706
    %v2711 = vshll.u32 %v2708, 16
    %v2712 = vshrl.u32 %v2708, 16
    %v2713 = vshll.u32 %v2709, 16
    %v2714 = vshrl.u32 %v2709, 16
    %vm2715 = vc.u32 %v2707, %v2711
    %v2716 = vsel %vm2715, 1, 0
    %v2717 = vadd.s32 %v2707, %v2711
    %v2718 = vadd.s32 %v2710, %v2716
    %vm2719 = vc.u32 %v2717, %v2713
    %v2720 = vsel %vm2719, 1, 0
    %v2721 = vadd.s32 %v2717, %v2713
    %v2722 = vadd.s32 %v2718, %v2720
    %v2723 = vadd.s32 %v2722, %v2712
    %v2724 = vadd.s32 %v2723, %v2714
    %v2725 = vand.u32 %v2702, 65535
    %v2726 = vshrl.u32 %v2702, 16
    %v2727 = vand.u32 %v2697, 65535
    %v2728 = vshrl.u32 %v2697, 16
    %v2729 = vmul.u32 %v2725, %v2727
    %v2730 = vmul.u32 %v2725, %v2728
    %v2731 = vmul.u32 %v2726, %v2727
    %v2732 = vmul.u32 %v2726, %v2728
    %v2733 = vshll.u32 %v2730, 16
    %v2734 = vshrl.u32 %v2730, 16
    %v2735 = vshll.u32 %v2731, 16
    %v2736 = vshrl.u32 %v2731, 16
    %vm2737 = vc.u32 %v2729, %v2733
    %v2738 = vsel %vm2737, 1, 0
    %v2739 = vadd.s32 %v2729, %v2733
    %v2740 = vadd.s32 %v2732, %v2738
    %vm2741 = vc.u32 %v2739, %v2735
    %v2742 = vsel %vm2741, 1, 0
    %v2743 = vadd.s32 %v2739, %v2735
    %v2744 = vadd.s32 %v2740, %v2742
    %v2745 = vadd.s32 %v2744, %v2734
    %v2746 = vadd.s32 %v2745, %v2736
    %v2747 = vmul.u32 %v2702, %v2693
    %v2748 = vadd.s32 %v2724, %v2743
    %vm2749 = vc.u32 %v2724, %v2743
    %v2750 = vadd.s32 %v2746, 1
    %v2751 = vsel %vm2749, %v2750, %v2746
    %v2752 = vadd.s32 %v2747, %v2751
    %v2753 = vadd.s32 %v2752, 536870912
    %v2754 = vshrl.u32 %v2753, 30
    %v2755 = vshll.u32 %v2754, 30
    %v2756 = vsub.s32 %v2752, %v2755
    %vm2757 = vcmp.lt.s32.totalorder %v2756, 0
    %v2758 = vsub.s32 0, %v2756
    %v2759 = vsel %vm2757, %v2758, %v2756
    %v2760 = vclz %v2759
    %v2761 = vsub.s32 %v2760, 2
    %vm2762 = vcmp.gt.s32.totalorder 0, %v2761
    %v2763 = vsel %vm2762, 0, %v2761
    %v2764 = vsub.s32 32, %v2763
    %v2765 = vshll.u32 %v2756, %v2763
    %v2766 = vshrl.u32 %v2748, %v2764
    %v2767 = vor.u32 %v2765, %v2766
    %v2768 = vsub.s32 4294967266, %v2763
    %v2769 = vadd.s32 %v2768, 127
    %v2770 = vshll.u32 %v2769, 23
    %v2771 = vor.u32 4788187, %v2770
    %v2772 = vand.u32 2147483647, %v2771
    %v2774 = vcvt.s32.f32 %v2767
    %v2775 = vmul.f32 %v2774, %v2772
    %v2776 = vxor.u32 %v2775, 2147483648
    %v2777 = vsel %vm2656, %v2776, %v2775
    %v2778 = vsub.s32 4, %v2754
    %v2779 = vsel %vm2656, %v2778, %v2754
    %v2780 = vsel %vm2655, %v482, %v2777
    %v2781 = vsel %vm2655, 0, %v2779
    %v2782 = vmul.f32 %v2780, %v2780
    %v2783 = vmul.f32 %v2782, -0.001358992
    %v2784 = vadd.f32 %v2783, 0.041655596
    %v2785 = vmul.f32 %v2782, %v2784
    %v2786 = vadd.f32 %v2785, -0.4999988
    %v2787 = vmul.f32 %v2782, %v2786
    %v2788 = vadd.f32 1.0, %v2787
    %v2789 = vmul.f32 %v2780, %v2780
    %v2790 = vmul.f32 %v2789, -0.00019511016
    %v2791 = vadd.f32 %v2790, 0.008332121
    %v2792 = vmul.f32 %v2789, %v2791
    %v2793 = vadd.f32 %v2792, -0.16666654
    %v2794 = vmul.f32 %v2789, %v2793
    %v2795 = vadd.f32 %v2794, 1.0
    %v2796 = vmul.f32 %v2795, %v2780
    %vm2797 = vweird.f32 %v482
    %v2798 = vadd.s32 %v2781, 3
    %v2799 = vand.u32 %v2798, 3
    %vm2800 = vcmp.lt.s32.totalorder %v2799, 2
    %vm2801 = vcmp.eq.s32.totalorder %v2799, 0
    %v2802 = vxor.u32 %v2796, 2147483648
    %v2803 = vsel %vm2801, %v2788, %v2802
    %vm2804 = vcmp.eq.s32.totalorder %v2799, 2
    %v2805 = vxor.u32 %v2788, 2147483648
    %v2806 = vsel %vm2804, %v2805, %v2796
    %v2807 = vsel %vm2800, %v2803, %v2806
    %v2808 = vsel %vm2797, nan, %v2807
    %v2809 = vand.u32 2147483647, %v483
    %vm2810 = vcmp.le.f32.partialorder %v2809, 0.7853982
    %vm2811 = vcmp.lt.s32.totalorder %v483, 0
    %v2812 = vand.u32 %v483, 2139095040
    %v2813 = vshrl.u32 %v2812, 23
    %v2814 = vsub.s32 %v2813, 127
    %v2815 = vand.u32 2147483647, %v483
    %v2816 = vand.u32 %v2815, 8388607
    %v2817 = vor.u32 %v2816, 8388608
    %v2818 = vsub.s32 0, %v2817
    %v2819 = vadd.s32 %v2814, 1
    %vm2820 = vcmp.gt.s32.totalorder %v2819, 0
    %v2821 = vsel %vm2820, %v2819, 0
    %v2822 = vshrl.u32 %v2821, 5
    %v2823 = vand.u32 %v2821, 31
    %v2824 = vsub.s32 32, %v2823
    %v2825 = vshrl.u32 683565275, %v2824
    %v2826 = vshll.u32 683565275, %v2823
    %v2827 = vshrl.u32 2475754826, %v2824
    %v2828 = vor.u32 %v2826, %v2827
    %v2829 = vshll.u32 2475754826, %v2823
    %v2830 = vshrl.u32 2131351028, %v2824
    %v2831 = vor.u32 %v2829, %v2830
    %v2832 = vshll.u32 2131351028, %v2823
    %v2833 = vshrl.u32 2102212464, %v2824
    %v2834 = vor.u32 %v2832, %v2833
    %v2835 = vshll.u32 2102212464, %v2823
    %v2836 = vshrl.u32 920167782, %v2824
    %v2837 = vor.u32 %v2835, %v2836
    %v2838 = vshll.u32 920167782, %v2823
    %v2839 = vshrl.u32 1326507024, %v2824
    %v2840 = vor.u32 %v2838, %v2839
    %vm2841 = vcmp.lt.s32.totalorder %v2822, 1
    %vm2842 = vcmp.lt.s32.totalorder %v2822, 2
    %vm2843 = vcmp.lt.s32.totalorder %v2822, 3
    %vm2844 = vcmp.lt.s32.totalorder %v2822, 4
    %v2845 = vsel %vm2841, %v2825, %v2828
    %v2846 = vsel %vm2844, %v2834, 2102212464
    %v2847 = vsel %vm2843, %v2831, %v2846
    %v2848 = vsel %vm2842, %v2845, %v2847
    %v2849 = vsel %vm2841, %v2828, %v2831
    %v2850 = vsel %vm2844, %v2837, 920167782
    %v2851 = vsel %vm2843, %v2834, %v2850
    %v2852 = vsel %vm2842, %v2849, %v2851
    %v2853 = vsel %vm2841, %v2831, %v2834
    %v2854 = vsel %vm2844, %v2840, 1326507024
    %v2855 = vsel %vm2843, %v2837, %v2854
    %v2856 = vsel %vm2842, %v2853, %v2855
    %v2857 = vshll.u32 %v2817, 8
    %v2858 = vand.u32 %v2857, 65535
    %v2859 = vshrl.u32 %v2857, 16
    %v2860 = vand.u32 %v2856, 65535
    %v2861 = vshrl.u32 %v2856, 16
    %v2862 = vmul.u32 %v2858, %v2860
    %v2863 = vmul.u32 %v2858, %v2861
    %v2864 = vmul.u32 %v2859, %v2860
    %v2865 = vmul.u32 %v2859, %v2861
    %v2866 = vshll.u32 %v2863, 16
    %v2867 = vshrl.u32 %v2863, 16
    %v2868 = vshll.u32 %v2864, 16
    %v2869 = vshrl.u32 %v2864, 16
    %vm2870 = vc.u32 %v2862, %v2866
    %v2871 = vsel %vm2870, 1, 0
    %v2872 = vadd.s32 %v2862, %v2866
    %v2873 = vadd.s32 %v2865, %v2871
    %vm2874 = vc.u32 %v2872, %v2868
    %v2875 = vsel %vm2874, 1, 0
    %v2876 = vadd.s32 %v2872, %v2868
    %v2877 = vadd.s32 %v2873, %v2875
    %v2878 = vadd.s32 %v2877, %v2867
    %v2879 = vadd.s32 %v2878, %v2869
    %v2880 = vand.u32 %v2857, 65535
    %v2881 = vshrl.u32 %v2857, 16
    %v2882 = vand.u32 %v2852, 65535
    %v2883 = vshrl.u32 %v2852, 16
    %v2884 = vmul.u32 %v2880, %v2882
    %v2885 = vmul.u32 %v2880, %v2883
    %v2886 = vmul.u32 %v2881, %v2882
    %v2887 = vmul.u32 %v2881, %v2883
    %v2888 = vshll.u32 %v2885, 16
    %v2889 = vshrl.u32 %v2885, 16
    %v2890 = vshll.u32 %v2886, 16
    %v2891 = vshrl.u32 %v2886, 16
    %vm2892 = vc.u32 %v2884, %v2888
    %v2893 = vsel %vm2892, 1, 0
    %v2894 = vadd.s32 %v2884, %v2888
    %v2895 = vadd.s32 %v2887, %v2893
    %vm2896 = vc.u32 %v2894, %v2890
    %v2897 = vsel %vm2896, 1, 0
    %v2898 = vadd.s32 %v2894, %v2890
    %v2899 = vadd.s32 %v2895, %v2897
    %v2900 = vadd.s32 %v2899, %v2889
    %v2901 = vadd.s32 %v2900, %v2891
    %v2902 = vmul.u32 %v2857, %v2848
    %v2903 = vadd.s32 %v2879, %v2898
    %vm2904 = vc.u32 %v2879, %v2898
    %v2905 = vadd.s32 %v2901, 1
    %v2906 = vsel %vm2904, %v2905, %v2901
    %v2907 = vadd.s32 %v2902, %v2906
    %v2908 = vadd.s32 %v2907, 536870912
    %v2909 = vshrl.u32 %v2908, 30
    %v2910 = vshll.u32 %v2909, 30
    %v2911 = vsub.s32 %v2907, %v2910
    %vm2912 = vcmp.lt.s32.totalorder %v2911, 0
    %v2913 = vsub.s32 0, %v2911
    %v2914 = vsel %vm2912, %v2913, %v2911
    %v2915 = vclz %v2914
    %v2916 = vsub.s32 %v2915, 2
    %vm2917 = vcmp.gt.s32.totalorder 0, %v2916
    %v2918 = vsel %vm2917, 0, %v2916
    %v2919 = vsub.s32 32, %v2918
    %v2920 = vshll.u32 %v2911, %v2918
    %v2921 = vshrl.u32 %v2903, %v2919
    %v2922 = vor.u32 %v2920, %v2921
    %v2923 = vsub.s32 4294967266, %v2918
    %v2924 = vadd.s32 %v2923, 127
    %v2925 = vshll.u32 %v2924, 23
    %v2926 = vor.u32 4788187, %v2925
    %v2927 = vand.u32 2147483647, %v2926
    %v2929 = vcvt.s32.f32 %v2922
    %v2930 = vmul.f32 %v2929, %v2927
    %v2931 = vxor.u32 %v2930, 2147483648
    %v2932 = vsel %vm2811, %v2931, %v2930
    %v2933 = vsub.s32 4, %v2909
    %v2934 = vsel %vm2811, %v2933, %v2909
    %v2935 = vsel %vm2810, %v483, %v2932
    %v2936 = vsel %vm2810, 0, %v2934
    %v2937 = vmul.f32 %v2935, %v2935
    %v2938 = vmul.f32 %v2937, -0.001358992
    %v2939 = vadd.f32 %v2938, 0.041655596
    %v2940 = vmul.f32 %v2937, %v2939
    %v2941 = vadd.f32 %v2940, -0.4999988
    %v2942 = vmul.f32 %v2937, %v2941
    %v2943 = vadd.f32 1.0, %v2942
    %v2944 = vmul.f32 %v2935, %v2935
    %v2945 = vmul.f32 %v2944, -0.00019511016
    %v2946 = vadd.f32 %v2945, 0.008332121
    %v2947 = vmul.f32 %v2944, %v2946
    %v2948 = vadd.f32 %v2947, -0.16666654
    %v2949 = vmul.f32 %v2944, %v2948
    %v2950 = vadd.f32 %v2949, 1.0
    %v2951 = vmul.f32 %v2950, %v2935
    %vm2952 = vweird.f32 %v483
    %v2953 = vadd.s32 %v2936, 3
    %v2954 = vand.u32 %v2953, 3
    %vm2955 = vcmp.lt.s32.totalorder %v2954, 2
    %vm2956 = vcmp.eq.s32.totalorder %v2954, 0
    %v2957 = vxor.u32 %v2951, 2147483648
    %v2958 = vsel %vm2956, %v2943, %v2957
    %vm2959 = vcmp.eq.s32.totalorder %v2954, 2
    %v2960 = vxor.u32 %v2943, 2147483648
    %v2961 = vsel %vm2959, %v2960, %v2951
    %v2962 = vsel %vm2955, %v2958, %v2961
    %v2963 = vsel %vm2952, nan, %v2962
    %v2964 = vmul.f32 %v468, %v1878
    %v2965 = vmul.f32 %v469, %v2033
    %v2966 = vmul.f32 %v470, %v2188
    %v2967 = vmul.f32 %v471, %v2343
    %v2968 = vmul.f32 %v472, %v2498
    %v2969 = vmul.f32 %v473, %v2653
    %v2970 = vmul.f32 %v474, %v2808
    %v2971 = vmul.f32 %v475, %v2963
    %v2972 = vld [vmem:[#allocation3] sm:$0xf]
    %v2973 = vld [vmem:[#allocation3 + $0x8] sm:$0xf]
    %v2974 = vld [vmem:[#allocation3 + $0x10] sm:$0xf]
    %v2975 = vld [vmem:[#allocation3 + $0x18] sm:$0xf]
    %v2976 = vld [vmem:[#allocation3 + $0x20] sm:$0xf]
    %v2977 = vld [vmem:[#allocation3 + $0x28] sm:$0xf]
    %v2978 = vld [vmem:[#allocation3 + $0x30] sm:$0xf]
    %v2979 = vld [vmem:[#allocation3 + $0x38] sm:$0xf]
    %v2980 = vadd.f32 %v2972, %v1716
    %v2981 = vadd.f32 %v2973, %v1717
    %v2982 = vadd.f32 %v2974, %v1718
    %v2983 = vadd.f32 %v2975, %v1719
    %v2984 = vadd.f32 %v2976, %v1720
    %v2985 = vadd.f32 %v2977, %v1721
    %v2986 = vadd.f32 %v2978, %v1722
    %v2987 = vadd.f32 %v2979, %v1723
    %2988 = vst [vmem:[#allocation6] sm:$0xf] %v2980
    %2989 = vst [vmem:[#allocation6 + $0x8] sm:$0xf] %v2981
    %2990 = vst [vmem:[#allocation6 + $0x10] sm:$0xf] %v2982
    %2991 = vst [vmem:[#allocation6 + $0x18] sm:$0xf] %v2983
    %2992 = vst [vmem:[#allocation6 + $0x20] sm:$0xf] %v2984
    %2993 = vst [vmem:[#allocation6 + $0x28] sm:$0xf] %v2985
    %2994 = vst [vmem:[#allocation6 + $0x30] sm:$0xf] %v2986
    %2995 = vst [vmem:[#allocation6 + $0x38] sm:$0xf] %v2987
    %v2996 = vld [vmem:[#allocation3] sm:$0xf0]
    %v2997 = vld [vmem:[#allocation3 + $0x8] sm:$0xf0]
    %v2998 = vld [vmem:[#allocation3 + $0x10] sm:$0xf0]
    %v2999 = vld [vmem:[#allocation3 + $0x18] sm:$0xf0]
    %v3000 = vld [vmem:[#allocation3 + $0x20] sm:$0xf0]
    %v3001 = vld [vmem:[#allocation3 + $0x28] sm:$0xf0]
    %v3002 = vld [vmem:[#allocation3 + $0x30] sm:$0xf0]
    %v3003 = vld [vmem:[#allocation3 + $0x38] sm:$0xf0]
    %v3012 = vrot.slane %v2964, 4
    %v3013 = vrot.slane %v2965, 4
    %v3014 = vrot.slane %v2966, 4
    %v3015 = vrot.slane %v2967, 4
    %v3016 = vrot.slane %v2968, 4
    %v3017 = vrot.slane %v2969, 4
    %v3018 = vrot.slane %v2970, 4
    %v3019 = vrot.slane %v2971, 4
    %v3028 = vadd.f32 %v2996, %v3012
    %v3029 = vadd.f32 %v2997, %v3013
    %v3030 = vadd.f32 %v2998, %v3014
    %v3031 = vadd.f32 %v2999, %v3015
    %v3032 = vadd.f32 %v3000, %v3016
    %v3033 = vadd.f32 %v3001, %v3017
    %v3034 = vadd.f32 %v3002, %v3018
    %v3035 = vadd.f32 %v3003, %v3019
    %3036 = vst [vmem:[#allocation6] sm:$0xf0] %v3028
    %3037 = vst [vmem:[#allocation6 + $0x8] sm:$0xf0] %v3029
    %3038 = vst [vmem:[#allocation6 + $0x10] sm:$0xf0] %v3030
    %3039 = vst [vmem:[#allocation6 + $0x18] sm:$0xf0] %v3031
    %3040 = vst [vmem:[#allocation6 + $0x20] sm:$0xf0] %v3032
    %3041 = vst [vmem:[#allocation6 + $0x28] sm:$0xf0] %v3033
    %3042 = vst [vmem:[#allocation6 + $0x30] sm:$0xf0] %v3034
    %3043 = vst [vmem:[#allocation6 + $0x38] sm:$0xf0] %v3035
    // Predicated region
    $region14: #{tpu_custom_call.1} parent=1 // pred_check
      _
    $region15: #{tpu_custom_call.1} parent=1 // pred_check_branch
      %3045 = sbr.rel (0) target = $region17
    $region16: #{tpu_custom_call.1} parent=1 // pred_region
      %3047 = vsyncadd [#allocation5], 0
      %s3049 = sshll.u32 [#allocation6], 4
      %s3050 = int_to_ptr.vmem [resolvable:$true] %s3049
      %s3051 = sshll.u32 %s2, 4
      %s3052 = int_to_ptr.hbm [resolvable:$true] %s3051
      %3054 = dma.vmem_to_hbm [thread:$0]  %s3050, 1024, %s3052, [#allocation5]
    $region17: #{tpu_custom_call.1} parent=1 // pred_fallthru
      _
    // Predicated region
    $region18: #{tpu_custom_call.1} parent=1 // pred_check
      _
    $region19: #{tpu_custom_call.1} parent=1 // pred_check_branch
      %3056 = sbr.rel (0) target = $region21
    $region20: #{tpu_custom_call.1} parent=1 // pred_region
      %3058 = dma.done [#allocation5], 1024
    $region21: #{tpu_custom_call.1} parent=1 // pred_fallthru
      _
    %3059 = vsyncpa [#allocation4], 1
    %3060 = vsyncpa [#allocation5], 1

</llo_original>
